<compile_context>
chip_gen: v7x
topology: tpu7x:2x2x1
jax: 0.10.0
libtpu: 0.0.40
codegen_flags: <defaults>
</compile_context>

<pallas_src>
import functools

import jax
import jax.numpy as jnp
from jax import lax
from jax.experimental import pallas as pl
from jax.experimental.pallas import tpu as pltpu

LANE = 128   # TPU lane width; all feature dims are zero-padded to this.
N_W = 12     # number of [P, P] weight planes packed into the lane-stacked slab.


def densenet4_kernel(nout, nhid2, a_ref, x_ref, w_ref, att_ref, aout_ref):
    f32 = jnp.float32
    cdt = w_ref.dtype                       # weight storage dtype (bf16 default / f32)
    N, P = x_ref.shape

    def wband(i, n=1):
        # Lane-aligned static slice of the packed weight slab: columns [i*P, (i+n)*P).
        return w_ref[:, i * P:(i + n) * P]

    def mm_w(h, i, n=1):
        # activation @ weight-band on the MXU; weight stays in its storage dtype,
        # the (tiny) activation is packed to match, accumulation in f32.
        return jnp.dot(h.astype(cdt), wband(i, n), preferred_element_type=f32)

    def mm(a, b):
        # f32 activation x activation matmul (A-propagation, attention, H @ H.T).
        return jnp.dot(a, b, preferred_element_type=f32)

    def mm_t(a, b):
        # a @ b.T without materializing a transpose: contract on the last axes.
        return lax.dot_general(a, b, (((1,), (1,)), ((), ())),
                               preferred_element_type=f32)

    A = a_ref[...].astype(f32)              # hoisted once; reused by conv1/2/3/4

    # conv1 + relu ; conv2 + relu :  relu(A @ (H @ W))
    H = jnp.maximum(mm(A, mm_w(x_ref[...], 0)), 0.0)
    H = jnp.maximum(mm(A, mm_w(H, 1)), 0.0)

    # NLGCN: fused QKV projection -> attention -> output projection -> residual.
    qkv = mm_w(H, 2, 3)
    q, k, v = qkv[:, :P], qkv[:, P:2 * P], qkv[:, 2 * P:]
    s = mm_t(q, k)
    m = jnp.max(s, axis=-1, keepdims=True)
    e = jnp.exp(s - m)
    attn = e * pl.reciprocal(jnp.sum(e, axis=-1, keepdims=True), approx=True)
    H = H + mm_w(mm(attn, v), 5)

    # A_out = sigmoid(H @ H.T)   (dec2(H) is dead code in the reference forward).
    # Contract against a row-padded copy of H so the output tile is 128 lanes wide
    # (un-masked vst); the wrapper slices [:, :N] back out.
    if N == LANE:
        Hp = H
    else:
        Hp = jnp.concatenate([H, jnp.zeros((LANE - N, P), f32)], axis=0)
    aout_ref[...] = jax.nn.sigmoid(mm_t(H, Hp)).astype(aout_ref.dtype)

    # dense1..dense4 + relu. Bias is folded into row `nhid2` of each augmented weight;
    # column `nhid2` of H is a guaranteed-zero padding column that is set to 1 once and
    # self-propagates (wd_aug[nhid2, nhid2] == 1, relu(1) == 1). Row nhid2 of the padded
    # wg3 is zero, so the ones column is killed before conv3.
    col = lax.broadcasted_iota(jnp.int32, H.shape, 1)
    H = jnp.where(col == nhid2, 1.0, H)
    for i in range(4):
        H = jnp.maximum(mm_w(H, 6 + i), 0.0)

    # conv3 + relu
    H = jnp.maximum(mm(A, mm_w(H, 10)), 0.0)

    # conv4 + softmax over the real `nout` feature columns (padding masked out).
    # Exact divide here: these are the returned probabilities.
    att = mm(A, mm_w(H, 11))
    att = jnp.where(col < nout, att, -1e30)
    m = jnp.max(att, axis=-1, keepdims=True)
    e = jnp.exp(att - m)
    att_ref[...] = (e / jnp.sum(e, axis=-1, keepdims=True)).astype(att_ref.dtype)


def _pad2(x, rows, cols, dtype):
    out = jnp.zeros((rows, cols), dtype)
    return out.at[: x.shape[0], : x.shape[1]].set(x.astype(dtype))


def prepare_params(params, nhid2, dtype=jnp.bfloat16):
    """Pack all weights into one lane-stacked [P, 12*P] slab, fold the dense biases
    into an augmented row, zero-pad everything to the 128-lane width.

    Weight storage defaults to bf16 on every TPU generation (weights dominate HBM
    traffic and all MXUs consume bf16 natively); activations / accumulation / softmax /
    sigmoid stay f32 inside the kernel. Pass dtype=jnp.float32 for exact parity.
    """
    P = LANE
    # Guards for the bias-folding ones-column trick (see kernel comment).
    assert nhid2 < P, "bias folding needs a free padding column"
    for i in (1, 2, 3, 4):
        assert params[f"wd{i}"].shape == (nhid2, nhid2)
    assert params["wg2"].shape[1] == nhid2
    assert params["wo"].shape[1] == nhid2
    assert params["wg3"].shape[0] == nhid2, "row nhid2 of padded wg3 must be zero padding"

    def dense_aug(w, b):
        wa = _pad2(w, P, P, dtype)
        wa = wa.at[nhid2, : w.shape[1]].set(b.reshape(-1).astype(dtype))   # bias row
        wa = wa.at[nhid2, nhid2].set(jnp.asarray(1.0, dtype))              # ones column
        return wa

    bands = [
        _pad2(params["wg1"], P, P, dtype),
        _pad2(params["wg2"], P, P, dtype),
        _pad2(params["wq"], P, P, dtype),
        _pad2(params["wk"], P, P, dtype),
        _pad2(params["wv"], P, P, dtype),
        _pad2(params["wo"], P, P, dtype),
        dense_aug(params["wd1"], params["bd1"]),
        dense_aug(params["wd2"], params["bd2"]),
        dense_aug(params["wd3"], params["bd3"]),
        dense_aug(params["wd4"], params["bd4"]),
        _pad2(params["wg3"], P, P, dtype),
        _pad2(params["wg4"], P, P, dtype),
    ]
    return jnp.concatenate(bands, axis=1)     # [P, N_W * P]


def densenet4_forward(A_norm, X, wslab, nout, nhid2):
    """Batched forward: one grid point per graph ("parallel" axis -> megacore / second
    TensorCore on v7x); the weight slab is DMA'd once and kept resident via a constant
    index_map. Activations and A are always passed in f32.
    """
    B, N, _ = A_norm.shape
    P = LANE
    assert N <= LANE, "TODO(synk): large-N graphs need flash-style tiling of A/att/aout"
    assert wslab.shape == (P, N_W * P)

    x = jnp.zeros((B, N, P), jnp.float32).at[:, :, : X.shape[-1]].set(
        X.astype(jnp.float32))
    a = A_norm.astype(jnp.float32)

    att_pad, aout_pad = pl.pallas_call(
        functools.partial(densenet4_kernel, nout, nhid2),
        grid=(B,),
        in_specs=[
            pl.BlockSpec((None, N, N), lambda b: (b, 0, 0)),        # A, per graph
            pl.BlockSpec((None, N, P), lambda b: (b, 0, 0)),        # X, per graph
            pl.BlockSpec((P, N_W * P), lambda b: (0, 0)),           # weights, resident
        ],
        out_specs=(
            pl.BlockSpec((None, N, P), lambda b: (b, 0, 0)),        # Att (lane-padded)
            pl.BlockSpec((None, N, LANE), lambda b: (b, 0, 0)),     # A_out (lane-padded)
        ),
        out_shape=(
            jax.ShapeDtypeStruct((B, N, P), jnp.float32),
            jax.ShapeDtypeStruct((B, N, LANE), jnp.float32),
        ),
        compiler_params=pltpu.CompilerParams(dimension_semantics=("parallel",)),
    )(a, x, wslab)
    return att_pad[:, :, :nout], aout_pad[:, :, :N]


def _reference_forward_single(A_norm, X, p):
    """Pure-JAX f32 reference with identical math, for correctness check (one graph)."""
    relu = lambda x: jnp.maximum(x, 0.0)
    H = relu(A_norm @ (X @ p["wg1"]))
    H = relu(A_norm @ (H @ p["wg2"]))
    q, k, v = H @ p["wq"], H @ p["wk"], H @ p["wv"]
    H = H + jax.nn.softmax(q @ k.T, axis=-1) @ v @ p["wo"]
    Aout = jax.nn.sigmoid(H @ H.T)
    H = relu(H @ p["wd1"] + p["bd1"])
    H = relu(H @ p["wd2"] + p["bd2"])
    H = relu(H @ p["wd3"] + p["bd3"])
    H = relu(H @ p["wd4"] + p["bd4"])
    Att = relu(A_norm @ (H @ p["wg3"]))
    Att = A_norm @ (Att @ p["wg4"])
    return jax.nn.softmax(Att, axis=1), Aout


if __name__ == "__main__":
    # Small shapes consistent with the module: B graphs of N nodes, nfeat input features.
    B, N, nfeat, nhid1, nhid2, nhid3, nout = 4, 8, 16, 32, 32, 16, 8

    key = jax.random.PRNGKey(0)
    keys = jax.random.split(key, 20)

    # Batch of deterministic random graphs -> symmetric, self-loops, symmetric norm.
    adj = (jax.random.uniform(keys[0], (B, N, N)) < 0.35).astype(jnp.float32)
    adj = jnp.maximum(adj, jnp.swapaxes(adj, -1, -2))
    a_hat = adj + jnp.eye(N, dtype=jnp.float32)
    d_inv_sqrt = 1.0 / jnp.sqrt(jnp.sum(a_hat, axis=-1))
    A_norm = a_hat * d_inv_sqrt[:, :, None] * d_inv_sqrt[:, None, :]

    X = jax.random.normal(keys[1], (B, N, nfeat), dtype=jnp.float32)

    def w(k, shape, scale=0.2):
        return scale * jax.random.normal(k, shape, dtype=jnp.float32)

    params = {
        "wg1": w(keys[2], (nfeat, nhid1)),
        "wg2": w(keys[3], (nhid1, nhid2)),
        "wq":  w(keys[4], (nhid2, nhid2)),
        "wk":  w(keys[5], (nhid2, nhid2)),
        "wv":  w(keys[6], (nhid2, nhid2)),
        "wo":  w(keys[7], (nhid2, nhid2)),
        "wd1": w(keys[8], (nhid2, nhid2)),  "bd1": w(keys[9],  (1, nhid2)),
        "wd2": w(keys[10], (nhid2, nhid2)), "bd2": w(keys[11], (1, nhid2)),
        "wd3": w(keys[12], (nhid2, nhid2)), "bd3": w(keys[13], (1, nhid2)),
        "wd4": w(keys[14], (nhid2, nhid2)), "bd4": w(keys[15], (1, nhid2)),
        "wg3": w(keys[16], (nhid2, nhid3)),
        "wg4": w(keys[17], (nhid3, nout)),
    }

    att_ref = jnp.stack([_reference_forward_single(A_norm[b], X[b], params)[0]
                         for b in range(B)])
    aout_ref = jnp.stack([_reference_forward_single(A_norm[b], X[b], params)[1]
                          for b in range(B)])

    # --- bf16-weight path (default on all generations: halves weight DMA bytes) ---
    w_bf16 = prepare_params(params, nhid2)               # dtype defaults to bf16
    att, aout = densenet4_forward(A_norm, X, w_bf16, nout, nhid2)
    jax.block_until_ready((att, aout))
    assert att.shape == (B, N, nout) and aout.shape == (B, N, N)
    assert bool(jnp.all(jnp.isfinite(att))) and bool(jnp.all(jnp.isfinite(aout)))
    # Sanity band only (bf16 weight rounding through ~10 weight matmuls); the strict
    # parity gate is the f32-weight path below.
    assert jnp.allclose(att, att_ref, atol=0.15, rtol=0.15)
    assert jnp.allclose(aout, aout_ref, atol=0.15, rtol=0.15)

    # --- f32-weight path (exact-parity option) ---
    w_f32 = prepare_params(params, nhid2, jnp.float32)
    att32, aout32 = densenet4_forward(A_norm, X, w_f32, nout, nhid2)
    jax.block_until_ready((att32, aout32))
    assert att32.shape == (B, N, nout) and aout32.shape == (B, N, N)
    # Only deliberate deviation from the reference: the EUP approximate reciprocal in
    # the internal attention softmax (the returned softmax uses an exact divide).
    assert jnp.allclose(att32, att_ref, atol=5e-3, rtol=5e-3)
    assert jnp.allclose(aout32, aout_ref, atol=5e-3, rtol=5e-3)

    print("KERNEL_OK")
</pallas_src>

<mosaic_0001>
module attributes {stable_mosaic.version = 11 : i64} {
  func.func @densenet4_kernel(%arg0: i32, %arg1: memref<1x8x8xf32, #tpu.memory_space<vmem>>, %arg2: memref<1x8x128xf32, #tpu.memory_space<vmem>>, %arg3: memref<128x1536xbf16, #tpu.memory_space<vmem>>, %arg4: memref<1x8x128xf32, #tpu.memory_space<vmem>>, %arg5: memref<1x8x128xf32, #tpu.memory_space<vmem>>) attributes {dimension_semantics = [#tpu.dimension_semantics<parallel>], iteration_bounds = array<i64: 4>, scalar_prefetch = 0 : i64, scratch_operands = 0 : i64, tpu.core_type = #tpu.core_type<tc>, window_params = [{transform_indices = @transform_0, window_bounds = array<i64: 1, 8, 8>}, {transform_indices = @transform_1, window_bounds = array<i64: 1, 8, 128>}, {pipeline_mode = #tpu.pipeline_mode<synchronous>, transform_indices = @transform_2, window_bounds = array<i64: 128, 1536>}, {transform_indices = @transform_3, window_bounds = array<i64: 1, 8, 128>}, {transform_indices = @transform_4, window_bounds = array<i64: 1, 8, 128>}]} {
    %c0 = arith.constant 0 : index
    %c0_0 = arith.constant 0 : index
    %c0_1 = arith.constant 0 : index
    %0 = vector.load %arg1[%c0, %c0_0, %c0_1] : memref<1x8x8xf32, #tpu.memory_space<vmem>>, vector<1x8x8xf32>
    %1 = vector.shape_cast %0 : vector<1x8x8xf32> to vector<8x8xf32>
    %c0_2 = arith.constant 0 : index
    %c0_3 = arith.constant 0 : index
    %c0_4 = arith.constant 0 : index
    %2 = vector.load %arg2[%c0_2, %c0_3, %c0_4] : memref<1x8x128xf32, #tpu.memory_space<vmem>>, vector<1x8x128xf32>
    %3 = vector.shape_cast %2 : vector<1x8x128xf32> to vector<8x128xf32>
    %4 = arith.truncf %3 : vector<8x128xf32> to vector<8x128xbf16>
    %c0_5 = arith.constant 0 : index
    %c0_6 = arith.constant 0 : index
    %5 = vector.load %arg3[%c0_5, %c0_6] : memref<128x1536xbf16, #tpu.memory_space<vmem>>, vector<128x128xbf16>
    %cst = arith.constant dense<0.000000e+00> : vector<8x128xf32>
    %6 = tpu.matmul %4, %5, %cst {dimension_numbers = #tpu.dot_dimension_numbers<[1], [0], [0], [1], [0, 0, 1, 1], [], []>} : vector<8x128xbf16>, vector<128x128xbf16>, vector<8x128xf32> -> vector<8x128xf32>
    %cst_7 = arith.constant dense<0.000000e+00> : vector<8x128xf32>
    %7 = tpu.matmul %1, %6, %cst_7 {dimension_numbers = #tpu.dot_dimension_numbers<[1], [0], [0], [1], [0, 0, 1, 1], [], []>} : vector<8x8xf32>, vector<8x128xf32>, vector<8x128xf32> -> vector<8x128xf32>
    %cst_8 = arith.constant 0.000000e+00 : f32
    %8 = vector.broadcast %cst_8 : f32 to vector<8x128xf32>
    %9 = arith.maximumf %7, %8 : vector<8x128xf32>
    %10 = arith.truncf %9 : vector<8x128xf32> to vector<8x128xbf16>
    %c0_9 = arith.constant 0 : index
    %c128 = arith.constant 128 : index
    %11 = vector.load %arg3[%c0_9, %c128] : memref<128x1536xbf16, #tpu.memory_space<vmem>>, vector<128x128xbf16>
    %cst_10 = arith.constant dense<0.000000e+00> : vector<8x128xf32>
    %12 = tpu.matmul %10, %11, %cst_10 {dimension_numbers = #tpu.dot_dimension_numbers<[1], [0], [0], [1], [0, 0, 1, 1], [], []>} : vector<8x128xbf16>, vector<128x128xbf16>, vector<8x128xf32> -> vector<8x128xf32>
    %cst_11 = arith.constant dense<0.000000e+00> : vector<8x128xf32>
    %13 = tpu.matmul %1, %12, %cst_11 {dimension_numbers = #tpu.dot_dimension_numbers<[1], [0], [0], [1], [0, 0, 1, 1], [], []>} : vector<8x8xf32>, vector<8x128xf32>, vector<8x128xf32> -> vector<8x128xf32>
    %cst_12 = arith.constant 0.000000e+00 : f32
    %14 = vector.broadcast %cst_12 : f32 to vector<8x128xf32>
    %15 = arith.maximumf %13, %14 : vector<8x128xf32>
    %16 = arith.truncf %15 : vector<8x128xf32> to vector<8x128xbf16>
    %c0_13 = arith.constant 0 : index
    %c256 = arith.constant 256 : index
    %17 = vector.load %arg3[%c0_13, %c256] : memref<128x1536xbf16, #tpu.memory_space<vmem>>, vector<128x384xbf16>
    %cst_14 = arith.constant dense<0.000000e+00> : vector<8x384xf32>
    %18 = tpu.matmul %16, %17, %cst_14 {dimension_numbers = #tpu.dot_dimension_numbers<[1], [0], [0], [1], [0, 0, 1, 1], [], []>} : vector<8x128xbf16>, vector<128x384xbf16>, vector<8x384xf32> -> vector<8x384xf32>
    %19 = vector.extract_strided_slice %18 {offsets = [0, 0], sizes = [8, 128], strides = [1, 1]} : vector<8x384xf32> to vector<8x128xf32>
    %20 = vector.extract_strided_slice %18 {offsets = [0, 128], sizes = [8, 128], strides = [1, 1]} : vector<8x384xf32> to vector<8x128xf32>
    %21 = vector.extract_strided_slice %18 {offsets = [0, 256], sizes = [8, 128], strides = [1, 1]} : vector<8x384xf32> to vector<8x128xf32>
    %cst_15 = arith.constant dense<0.000000e+00> : vector<8x8xf32>
    %22 = tpu.matmul %19, %20, %cst_15 {dimension_numbers = #tpu.dot_dimension_numbers<[1], [1], [0], [0], [0, 0, 1, 0], [], []>} : vector<8x128xf32>, vector<8x128xf32>, vector<8x8xf32> -> vector<8x8xf32>
    %cst_16 = arith.constant dense<0xFF800000> : vector<8xf32>
    %23 = vector.multi_reduction <maximumf>, %22, %cst_16 [1] : vector<8x8xf32> to vector<8xf32>
    %24 = vector.shape_cast %23 : vector<8xf32> to vector<8x1xf32>
    %25 = vector.broadcast %24 : vector<8x1xf32> to vector<8x8xf32>
    %26 = arith.subf %22, %25 : vector<8x8xf32>
    %27 = math.exp %26 : vector<8x8xf32>
    %cst_17 = arith.constant dense<0.000000e+00> : vector<8xf32>
    %28 = vector.multi_reduction <add>, %27, %cst_17 [1] : vector<8x8xf32> to vector<8xf32>
    %29 = vector.shape_cast %28 : vector<8xf32> to vector<8x1xf32>
    %30 = tpu.reciprocal %29 {approx = true} : vector<8x1xf32> -> vector<8x1xf32>
    %31 = vector.broadcast %30 : vector<8x1xf32> to vector<8x8xf32>
    %32 = arith.mulf %27, %31 : vector<8x8xf32>
    %cst_18 = arith.constant dense<0.000000e+00> : vector<8x128xf32>
    %33 = tpu.matmul %32, %21, %cst_18 {dimension_numbers = #tpu.dot_dimension_numbers<[1], [0], [0], [1], [0, 0, 1, 1], [], []>} : vector<8x8xf32>, vector<8x128xf32>, vector<8x128xf32> -> vector<8x128xf32>
    %34 = arith.truncf %33 : vector<8x128xf32> to vector<8x128xbf16>
    %c0_19 = arith.constant 0 : index
    %c640 = arith.constant 640 : index
    %35 = vector.load %arg3[%c0_19, %c640] : memref<128x1536xbf16, #tpu.memory_space<vmem>>, vector<128x128xbf16>
    %cst_20 = arith.constant dense<0.000000e+00> : vector<8x128xf32>
    %36 = tpu.matmul %34, %35, %cst_20 {dimension_numbers = #tpu.dot_dimension_numbers<[1], [0], [0], [1], [0, 0, 1, 1], [], []>} : vector<8x128xbf16>, vector<128x128xbf16>, vector<8x128xf32> -> vector<8x128xf32>
    %37 = arith.addf %15, %36 : vector<8x128xf32>
    %cst_21 = arith.constant 0.000000e+00 : f32
    %38 = vector.broadcast %cst_21 : f32 to vector<120x128xf32>
    %39 = tpu.concatenate %37, %38 in 0 : vector<8x128xf32>, vector<120x128xf32> -> vector<128x128xf32>
    %cst_22 = arith.constant dense<0.000000e+00> : vector<8x128xf32>
    %40 = tpu.matmul %37, %39, %cst_22 {dimension_numbers = #tpu.dot_dimension_numbers<[1], [1], [0], [0], [0, 0, 1, 0], [], []>} : vector<8x128xf32>, vector<128x128xf32>, vector<8x128xf32> -> vector<8x128xf32>
    %41 = arith.negf %40 : vector<8x128xf32>
    %42 = math.exp %41 : vector<8x128xf32>
    %cst_23 = arith.constant 1.000000e+00 : f32
    %43 = vector.broadcast %cst_23 : f32 to vector<8x128xf32>
    %44 = arith.addf %43, %42 : vector<8x128xf32>
    %45 = arith.divf %43, %44 : vector<8x128xf32>
    %c0_24 = arith.constant 0 : index
    %c0_25 = arith.constant 0 : index
    %c0_26 = arith.constant 0 : index
    %46 = vector.load %arg5[%c0_24, %c0_25, %c0_26] : memref<1x8x128xf32, #tpu.memory_space<vmem>>, vector<1x8x128xf32>
    %47 = vector.shape_cast %46 : vector<1x8x128xf32> to vector<8x128xf32>
    %48 = vector.shape_cast %45 : vector<8x128xf32> to vector<1x8x128xf32>
    tpu.vector_store %arg5[%c0_24, %c0_25, %c0_26], %48 {strides = array<i32>} : memref<1x8x128xf32, #tpu.memory_space<vmem>>, vector<1x8x128xf32>,
    %49 = tpu.iota {dimensions = array<i32: 1>} : vector<8x128xi32>
    %c32_i32 = arith.constant 32 : i32
    %50 = vector.broadcast %c32_i32 : i32 to vector<8x128xi32>
    %51 = arith.cmpi eq, %49, %50 : vector<8x128xi32>
    %cst_27 = arith.constant 1.000000e+00 : f32
    %52 = vector.broadcast %cst_27 : f32 to vector<8x128xf32>
    %53 = arith.select %51, %52, %37 : vector<8x128xi1>, vector<8x128xf32>
    %54 = arith.truncf %53 : vector<8x128xf32> to vector<8x128xbf16>
    %c0_28 = arith.constant 0 : index
    %c768 = arith.constant 768 : index
    %55 = vector.load %arg3[%c0_28, %c768] : memref<128x1536xbf16, #tpu.memory_space<vmem>>, vector<128x128xbf16>
    %cst_29 = arith.constant dense<0.000000e+00> : vector<8x128xf32>
    %56 = tpu.matmul %54, %55, %cst_29 {dimension_numbers = #tpu.dot_dimension_numbers<[1], [0], [0], [1], [0, 0, 1, 1], [], []>} : vector<8x128xbf16>, vector<128x128xbf16>, vector<8x128xf32> -> vector<8x128xf32>
    %cst_30 = arith.constant 0.000000e+00 : f32
    %57 = vector.broadcast %cst_30 : f32 to vector<8x128xf32>
    %58 = arith.maximumf %56, %57 : vector<8x128xf32>
    %59 = arith.truncf %58 : vector<8x128xf32> to vector<8x128xbf16>
    %c0_31 = arith.constant 0 : index
    %c896 = arith.constant 896 : index
    %60 = vector.load %arg3[%c0_31, %c896] : memref<128x1536xbf16, #tpu.memory_space<vmem>>, vector<128x128xbf16>
    %cst_32 = arith.constant dense<0.000000e+00> : vector<8x128xf32>
    %61 = tpu.matmul %59, %60, %cst_32 {dimension_numbers = #tpu.dot_dimension_numbers<[1], [0], [0], [1], [0, 0, 1, 1], [], []>} : vector<8x128xbf16>, vector<128x128xbf16>, vector<8x128xf32> -> vector<8x128xf32>
    %cst_33 = arith.constant 0.000000e+00 : f32
    %62 = vector.broadcast %cst_33 : f32 to vector<8x128xf32>
    %63 = arith.maximumf %61, %62 : vector<8x128xf32>
    %64 = arith.truncf %63 : vector<8x128xf32> to vector<8x128xbf16>
    %c0_34 = arith.constant 0 : index
    %c1024 = arith.constant 1024 : index
    %65 = vector.load %arg3[%c0_34, %c1024] : memref<128x1536xbf16, #tpu.memory_space<vmem>>, vector<128x128xbf16>
    %cst_35 = arith.constant dense<0.000000e+00> : vector<8x128xf32>
    %66 = tpu.matmul %64, %65, %cst_35 {dimension_numbers = #tpu.dot_dimension_numbers<[1], [0], [0], [1], [0, 0, 1, 1], [], []>} : vector<8x128xbf16>, vector<128x128xbf16>, vector<8x128xf32> -> vector<8x128xf32>
    %cst_36 = arith.constant 0.000000e+00 : f32
    %67 = vector.broadcast %cst_36 : f32 to vector<8x128xf32>
    %68 = arith.maximumf %66, %67 : vector<8x128xf32>
    %69 = arith.truncf %68 : vector<8x128xf32> to vector<8x128xbf16>
    %c0_37 = arith.constant 0 : index
    %c1152 = arith.constant 1152 : index
    %70 = vector.load %arg3[%c0_37, %c1152] : memref<128x1536xbf16, #tpu.memory_space<vmem>>, vector<128x128xbf16>
    %cst_38 = arith.constant dense<0.000000e+00> : vector<8x128xf32>
    %71 = tpu.matmul %69, %70, %cst_38 {dimension_numbers = #tpu.dot_dimension_numbers<[1], [0], [0], [1], [0, 0, 1, 1], [], []>} : vector<8x128xbf16>, vector<128x128xbf16>, vector<8x128xf32> -> vector<8x128xf32>
    %cst_39 = arith.constant 0.000000e+00 : f32
    %72 = vector.broadcast %cst_39 : f32 to vector<8x128xf32>
    %73 = arith.maximumf %71, %72 : vector<8x128xf32>
    %74 = arith.truncf %73 : vector<8x128xf32> to vector<8x128xbf16>
    %c0_40 = arith.constant 0 : index
    %c1280 = arith.constant 1280 : index
    %75 = vector.load %arg3[%c0_40, %c1280] : memref<128x1536xbf16, #tpu.memory_space<vmem>>, vector<128x128xbf16>
    %cst_41 = arith.constant dense<0.000000e+00> : vector<8x128xf32>
    %76 = tpu.matmul %74, %75, %cst_41 {dimension_numbers = #tpu.dot_dimension_numbers<[1], [0], [0], [1], [0, 0, 1, 1], [], []>} : vector<8x128xbf16>, vector<128x128xbf16>, vector<8x128xf32> -> vector<8x128xf32>
    %cst_42 = arith.constant dense<0.000000e+00> : vector<8x128xf32>
    %77 = tpu.matmul %1, %76, %cst_42 {dimension_numbers = #tpu.dot_dimension_numbers<[1], [0], [0], [1], [0, 0, 1, 1], [], []>} : vector<8x8xf32>, vector<8x128xf32>, vector<8x128xf32> -> vector<8x128xf32>
    %cst_43 = arith.constant 0.000000e+00 : f32
    %78 = vector.broadcast %cst_43 : f32 to vector<8x128xf32>
    %79 = arith.maximumf %77, %78 : vector<8x128xf32>
    %80 = arith.truncf %79 : vector<8x128xf32> to vector<8x128xbf16>
    %c0_44 = arith.constant 0 : index
    %c1408 = arith.constant 1408 : index
    %81 = vector.load %arg3[%c0_44, %c1408] : memref<128x1536xbf16, #tpu.memory_space<vmem>>, vector<128x128xbf16>
    %cst_45 = arith.constant dense<0.000000e+00> : vector<8x128xf32>
    %82 = tpu.matmul %80, %81, %cst_45 {dimension_numbers = #tpu.dot_dimension_numbers<[1], [0], [0], [1], [0, 0, 1, 1], [], []>} : vector<8x128xbf16>, vector<128x128xbf16>, vector<8x128xf32> -> vector<8x128xf32>
    %cst_46 = arith.constant dense<0.000000e+00> : vector<8x128xf32>
    %83 = tpu.matmul %1, %82, %cst_46 {dimension_numbers = #tpu.dot_dimension_numbers<[1], [0], [0], [1], [0, 0, 1, 1], [], []>} : vector<8x8xf32>, vector<8x128xf32>, vector<8x128xf32> -> vector<8x128xf32>
    %c8_i32 = arith.constant 8 : i32
    %84 = vector.broadcast %c8_i32 : i32 to vector<8x128xi32>
    %85 = arith.cmpi slt, %49, %84 : vector<8x128xi32>
    %cst_47 = arith.constant -1.000000e+30 : f32
    %86 = vector.broadcast %cst_47 : f32 to vector<8x128xf32>
    %87 = arith.select %85, %83, %86 : vector<8x128xi1>, vector<8x128xf32>
    %cst_48 = arith.constant dense<0xFF800000> : vector<8xf32>
    %88 = vector.multi_reduction <maximumf>, %87, %cst_48 [1] : vector<8x128xf32> to vector<8xf32>
    %89 = vector.shape_cast %88 : vector<8xf32> to vector<8x1xf32>
    %90 = vector.broadcast %89 : vector<8x1xf32> to vector<8x128xf32>
    %91 = arith.subf %87, %90 : vector<8x128xf32>
    %92 = math.exp %91 : vector<8x128xf32>
    %cst_49 = arith.constant dense<0.000000e+00> : vector<8xf32>
    %93 = vector.multi_reduction <add>, %92, %cst_49 [1] : vector<8x128xf32> to vector<8xf32>
    %94 = vector.shape_cast %93 : vector<8xf32> to vector<8x1xf32>
    %95 = vector.broadcast %94 : vector<8x1xf32> to vector<8x128xf32>
    %96 = arith.divf %92, %95 : vector<8x128xf32>
    %c0_50 = arith.constant 0 : index
    %c0_51 = arith.constant 0 : index
    %c0_52 = arith.constant 0 : index
    %97 = vector.load %arg4[%c0_50, %c0_51, %c0_52] : memref<1x8x128xf32, #tpu.memory_space<vmem>>, vector<1x8x128xf32>
    %98 = vector.shape_cast %97 : vector<1x8x128xf32> to vector<8x128xf32>
    %99 = vector.shape_cast %96 : vector<8x128xf32> to vector<1x8x128xf32>
    tpu.vector_store %arg4[%c0_50, %c0_51, %c0_52], %99 {strides = array<i32>} : memref<1x8x128xf32, #tpu.memory_space<vmem>>, vector<1x8x128xf32>,
    return
  }
  func.func @transform_0(%arg0: i32) -> (i32, i32, i32) {
    %c0_i32 = arith.constant 0 : i32
    %c0_i32_0 = arith.constant 0 : i32
    %c0_i32_1 = arith.constant 0 : i32
    return %arg0, %c0_i32, %c0_i32_0 : i32, i32, i32
  }
  func.func @transform_1(%arg0: i32) -> (i32, i32, i32) {
    %c0_i32 = arith.constant 0 : i32
    %c0_i32_0 = arith.constant 0 : i32
    %c0_i32_1 = arith.constant 0 : i32
    return %arg0, %c0_i32, %c0_i32_0 : i32, i32, i32
  }
  func.func @transform_2(%arg0: i32) -> (i32, i32) {
    %c0_i32 = arith.constant 0 : i32
    %c0_i32_0 = arith.constant 0 : i32
    %c0_i32_1 = arith.constant 0 : i32
    return %c0_i32, %c0_i32_0 : i32, i32
  }
  func.func @transform_3(%arg0: i32) -> (i32, i32, i32) {
    %c0_i32 = arith.constant 0 : i32
    %c0_i32_0 = arith.constant 0 : i32
    %c0_i32_1 = arith.constant 0 : i32
    return %arg0, %c0_i32, %c0_i32_0 : i32, i32, i32
  }
  func.func @transform_4(%arg0: i32) -> (i32, i32, i32) {
    %c0_i32 = arith.constant 0 : i32
    %c0_i32_0 = arith.constant 0 : i32
    %c0_i32_1 = arith.constant 0 : i32
    return %arg0, %c0_i32, %c0_i32_0 : i32, i32, i32
  }
}

</mosaic_0001>

<llo_original>
// kernel: tpu_custom_call.1
$region0: #{tpu_custom_call.1}
  #allocation0 [shape = 'u32[]', space=smem, size = 0x4, offset = 0x4, fixed_abs, tag = 'smem constant byte address 0x4 - core index']
  #allocation1 [shape = 'u32[144,128]{1,0:T(1,128)}', space=vmem, size = 0x12000, scoped, tag = 'internal scratch']
  %s0 = inlined_call_operand.hbm [shape: f32[4,8,8], index: 0, kind: input, shape index: {}]
  %s1 = inlined_call_operand.hbm [shape: f32[4,8,128], index: 1, kind: input, shape index: {}]
  %s2 = inlined_call_operand.hbm [shape: bf16[128,1536], index: 2, kind: input, shape index: {}]
  %s3 = inlined_call_operand.hbm [shape: f32[4,8,128], index: 3, kind: output, shape index: {0}]
  %s4 = inlined_call_operand.hbm [shape: f32[4,8,128], index: 4, kind: output, shape index: {1}]
  %5 = xla_tuple %s3, %s4
  %s6 = sld [smem:[#allocation0]]
  $region65: #{tpu_custom_call.1} parent=0
    _
  %s8 = ssub.s32 1, %s6
  %s9 = scalar_select 0, %s8, %s6
  $region1: #{tpu_custom_call.1} parent=0
    #allocation2 [shape = 'u8[8192]{0}', space=vmem, size = 0x2000, scoped, tag = 'input window, operand 0']
    #allocation3 [shape = 's32[2]{0}', space=sflag, size = 0x8, scoped, tag = 'scoped memory for tpu_custom_call.1']
    #allocation4 [shape = 's32[2]{0}', space=sflag, size = 0x8, scoped, tag = 'scoped memory for tpu_custom_call.1']
    #allocation5 [shape = 'u8[8192]{0}', space=vmem, size = 0x2000, scoped, tag = 'input window, operand 1']
    #allocation6 [shape = 's32[2]{0}', space=sflag, size = 0x8, scoped, tag = 'scoped memory for tpu_custom_call.1']
    #allocation7 [shape = 'u8[393216]{0}', space=vmem, size = 0x60000, scoped, tag = 'input window, operand 2, single buffered']
    #allocation8 [shape = 'u8[8192]{0}', space=vmem, size = 0x2000, scoped, tag = 'output window, operand 0']
    #allocation9 [shape = 'u8[8192]{0}', space=vmem, size = 0x2000, scoped, tag = 'output window, operand 1']
    #allocation10 [shape = 's32[2]{0}', space=sflag, size = 0x8, scoped, tag = 'scoped memory for tpu_custom_call.1']
    %10 = vsyncpa [#allocation3], 0
    %s11 = scalar_lea.sflag [#allocation3], 1
    %12 = vsyncpa %s11, 0
    %13 = vsyncpa [#allocation6], 0
    %s14 = scalar_lea.sflag [#allocation6], 1
    %15 = vsyncpa %s14, 0
    %16 = vsyncpa [#allocation4], 0
    %s17 = scalar_lea.sflag [#allocation4], 1
    %18 = vsyncpa %s17, 0
    %19 = vsyncpa [#allocation10], 0
    %s20 = scalar_lea.sflag [#allocation10], 1
    %21 = vsyncpa %s20, 0
    loop: start=0, step=1, limit=6
    $region2: #{tpu_custom_call.1} parent=1 // loop_pre_header
      _
    $region3: #{tpu_custom_call.1} parent=1 // loop_header
      %s23 = sphi 0, %s27
      %p24 = scmp.ge.s32.totalorder %s23, 6
      %s33 = sphi 0, %s35
      %s36 = sphi 0, %s33
      %s37 = sphi 0, %s36
      %s53 = sphi 0, %s37
      %s59 = sphi 0, %s61
      %s62 = sphi 0, %s59
      %s63 = sphi 0, %s62
      %s79 = sphi 0, %s63
      %s83 = sphi 0, %s83
      %s85 = sphi 0, %s83
      %s86 = sphi 0, %s85
      %s100 = sphi 0, %s86
      %s106 = sphi 0, %s108
      %s109 = sphi 0, %s106
      %s110 = sphi 0, %s109
      %s126 = sphi 0, %s110
      %s132 = sphi 0, %s134
      %s135 = sphi 0, %s132
      %s136 = sphi 0, %s135
      %s152 = sphi 0, %s136
    $region4: #{tpu_custom_call.1} parent=1 // loop_header_branch
      %26 = sbr.rel (%p24) target = $region8
    $region5: #{tpu_custom_call.1} parent=1 // loop_body
      %s28 = ssub.s32 %s23, 1
      %s29 = ssub.s32 %s23, 2
      %s30 = sadd.s32 %s23, 1
      %s31 = ssub.s32 %s23, %s30
      %p32 = scmp.eq.s32.totalorder %s31, 0
      %s34 = sadd.s32 %s33, 1
      %s35 = scalar_select %p32, %s33, %s34
      %p38 = pneg %p32
      %p39 = scmp.eq.s32.totalorder %s23, 3
      %p40 = por %p38, %p39
      %p41 = scmp.ne.s32.totalorder %s33, %s36
      %p42 = scmp.eq.s32.totalorder %s23, 0
      %p43 = por %p41, %p42
      %p44 = scmp.ne.s32.totalorder %s33, %s36
      %p45 = scmp.eq.s32.totalorder %s28, 3
      %p46 = por %p44, %p45
      %p47 = scmp.ne.s32.totalorder %s36, %s37
      %p48 = scmp.eq.s32.totalorder %s28, 0
      %p49 = por %p47, %p48
      %p50 = scmp.ne.s32.totalorder %s36, %s37
      %p51 = scmp.eq.s32.totalorder %s29, 3
      %p52 = por %p50, %p51
      %p54 = scmp.ne.s32.totalorder %s37, %s53
      %p55 = scmp.eq.s32.totalorder %s29, 0
      %p56 = por %p54, %p55
      %s57 = ssub.s32 %s23, %s30
      %p58 = scmp.eq.s32.totalorder %s57, 0
      %s60 = sadd.s32 %s59, 1
      %s61 = scalar_select %p58, %s59, %s60
      %p64 = pneg %p58
      %p65 = scmp.eq.s32.totalorder %s23, 3
      %p66 = por %p64, %p65
      %p67 = scmp.ne.s32.totalorder %s59, %s62
      %p68 = scmp.eq.s32.totalorder %s23, 0
      %p69 = por %p67, %p68
      %p70 = scmp.ne.s32.totalorder %s59, %s62
      %p71 = scmp.eq.s32.totalorder %s28, 3
      %p72 = por %p70, %p71
      %p73 = scmp.ne.s32.totalorder %s62, %s63
      %p74 = scmp.eq.s32.totalorder %s28, 0
      %p75 = por %p73, %p74
      %p76 = scmp.ne.s32.totalorder %s62, %s63
      %p77 = scmp.eq.s32.totalorder %s29, 3
      %p78 = por %p76, %p77
      %p80 = scmp.ne.s32.totalorder %s63, %s79
      %p81 = scmp.eq.s32.totalorder %s29, 0
      %p82 = por %p80, %p81
      %s84 = sadd.s32 %s83, 1
      %p87 = scmp.eq.s32.totalorder %s23, 3
      %p88 = scmp.ne.s32.totalorder %s83, %s85
      %p89 = scmp.eq.s32.totalorder %s23, 0
      %p90 = por %p88, %p89
      %p91 = scmp.ne.s32.totalorder %s83, %s85
      %p92 = scmp.eq.s32.totalorder %s28, 3
      %p93 = por %p91, %p92
      %p94 = scmp.ne.s32.totalorder %s85, %s86
      %p95 = scmp.eq.s32.totalorder %s28, 0
      %p96 = por %p94, %p95
      %p97 = scmp.ne.s32.totalorder %s85, %s86
      %p98 = scmp.eq.s32.totalorder %s29, 3
      %p99 = por %p97, %p98
      %p101 = scmp.ne.s32.totalorder %s86, %s100
      %p102 = scmp.eq.s32.totalorder %s29, 0
      %p103 = por %p101, %p102
      %s104 = ssub.s32 %s23, %s30
      %p105 = scmp.eq.s32.totalorder %s104, 0
      %s107 = sadd.s32 %s106, 1
      %s108 = scalar_select %p105, %s106, %s107
      %p111 = pneg %p105
      %p112 = scmp.eq.s32.totalorder %s23, 3
      %p113 = por %p111, %p112
      %p114 = scmp.ne.s32.totalorder %s106, %s109
      %p115 = scmp.eq.s32.totalorder %s23, 0
      %p116 = por %p114, %p115
      %p117 = scmp.ne.s32.totalorder %s106, %s109
      %p118 = scmp.eq.s32.totalorder %s28, 3
      %p119 = por %p117, %p118
      %p120 = scmp.ne.s32.totalorder %s109, %s110
      %p121 = scmp.eq.s32.totalorder %s28, 0
      %p122 = por %p120, %p121
      %p123 = scmp.ne.s32.totalorder %s109, %s110
      %p124 = scmp.eq.s32.totalorder %s29, 3
      %p125 = por %p123, %p124
      %p127 = scmp.ne.s32.totalorder %s110, %s126
      %p128 = scmp.eq.s32.totalorder %s29, 0
      %p129 = por %p127, %p128
      %s130 = ssub.s32 %s23, %s30
      %p131 = scmp.eq.s32.totalorder %s130, 0
      %s133 = sadd.s32 %s132, 1
      %s134 = scalar_select %p131, %s132, %s133
      %p137 = pneg %p131
      %p138 = scmp.eq.s32.totalorder %s23, 3
      %p139 = por %p137, %p138
      %p140 = scmp.ne.s32.totalorder %s132, %s135
      %p141 = scmp.eq.s32.totalorder %s23, 0
      %p142 = por %p140, %p141
      %p143 = scmp.ne.s32.totalorder %s132, %s135
      %p144 = scmp.eq.s32.totalorder %s28, 3
      %p145 = por %p143, %p144
      %p146 = scmp.ne.s32.totalorder %s135, %s136
      %p147 = scmp.eq.s32.totalorder %s28, 0
      %p148 = por %p146, %p147
      %p149 = scmp.ne.s32.totalorder %s135, %s136
      %p150 = scmp.eq.s32.totalorder %s29, 3
      %p151 = por %p149, %p150
      %p153 = scmp.ne.s32.totalorder %s136, %s152
      %p154 = scmp.eq.s32.totalorder %s29, 0
      %p155 = por %p153, %p154
      %p156 = scmp.le.s32.totalorder 1, %s23
      %p157 = scmp.lt.s32.totalorder %s23, 5
      %p158 = pnand %p156, %p157
      %p159 = pneg %p158
      // Predicated region
      $region9: #{tpu_custom_call.1} parent=5 // pred_check
        _
      $region10: #{tpu_custom_call.1} parent=5 // pred_check_branch
        %161 = sbr.rel (%p158) target = $region12
      $region11: #{tpu_custom_call.1} parent=5 // pred_region
        %s162 = ssub.s32 %s23, 1
        // Predicated region
        $region13: #{tpu_custom_call.1} parent=11 // pred_check
          %p163 = pneg %p96
        $region14: #{tpu_custom_call.1} parent=11 // pred_check_branch
          %165 = sbr.rel (%p163) target = $region16
        $region15: #{tpu_custom_call.1} parent=11 // pred_region
          %s167 = ssub.s32 12288, 12288
          %168 = vsyncadd [#allocation6], %s167
          %s169 = sshll.u32 [#allocation7], 4
          %s170 = int_to_ptr.vmem [resolvable:$true] %s169
          %175 = dma.hbm_to_vmem [thread:$0]  %s2, 12288, %s170, [#allocation6], 768, 768, 48
        $region16: #{tpu_custom_call.1} parent=11 // pred_fallthru
          _
      $region12: #{tpu_custom_call.1} parent=5 // pred_fallthru
        _
      %p176 = scmp.lt.s32.totalorder %s23, 4
      // Predicated region
      $region17: #{tpu_custom_call.1} parent=5 // pred_check
        %p177 = pneg %p176
      $region18: #{tpu_custom_call.1} parent=5 // pred_check_branch
        %179 = sbr.rel (%p177) target = $region20
      $region19: #{tpu_custom_call.1} parent=5 // pred_region
        // Predicated region
        $region21: #{tpu_custom_call.1} parent=19 // pred_check
          %p180 = pneg %p43
        $region22: #{tpu_custom_call.1} parent=19 // pred_check_branch
          %182 = sbr.rel (%p180) target = $region24
        $region23: #{tpu_custom_call.1} parent=19 // pred_region
          %s183 = sand.u32 %s33, 1
          %s184 = scalar_lea.sflag [#allocation3], %s183
          %s185 = sand.u32 %s33, 1
          %s186 = smul.addr %s185, 8
          %s187 = scalar_lea.vmem [#allocation2], %s186
          %s189 = ssub.s32 128, 128
          %190 = vsyncadd %s184, %s189
          %s191 = smul.addr %s23, 128
          %s192 = scalar_lea.hbm %s0, %s191
          %s194 = sshll.u32 %s187, 4
          %s195 = int_to_ptr.vmem [resolvable:$true] %s194
          %197 = dma.hbm_to_vmem [thread:$0]  %s192, 128, %s195, %s184
        $region24: #{tpu_custom_call.1} parent=19 // pred_fallthru
          _
        // Predicated region
        $region25: #{tpu_custom_call.1} parent=19 // pred_check
          %p198 = pneg %p69
        $region26: #{tpu_custom_call.1} parent=19 // pred_check_branch
          %200 = sbr.rel (%p198) target = $region28
        $region27: #{tpu_custom_call.1} parent=19 // pred_region
          %s201 = sand.u32 %s23, 1
          %s202 = scalar_lea.sflag [#allocation6], %s201
          %s203 = sand.u32 %s59, 1
          %s204 = smul.addr %s203, 8
          %s205 = scalar_lea.vmem [#allocation5], %s204
          %s207 = ssub.s32 128, 128
          %208 = vsyncadd %s202, %s207
          %s209 = smul.addr %s23, 128
          %s210 = scalar_lea.hbm %s1, %s209
          %s212 = sshll.u32 %s205, 4
          %s213 = int_to_ptr.vmem [resolvable:$true] %s212
          %215 = dma.hbm_to_vmem [thread:$0]  %s210, 128, %s213, %s202
        $region28: #{tpu_custom_call.1} parent=19 // pred_fallthru
          _
      $region20: #{tpu_custom_call.1} parent=5 // pred_fallthru
        _
      %p216 = scmp.le.s32.totalorder 1, %s23
      %p217 = scmp.lt.s32.totalorder %s23, 5
      %p218 = pnand %p216, %p217
      %p219 = pneg %p218
      // Predicated region
      $region29: #{tpu_custom_call.1} parent=5 // pred_check
        _
      $region30: #{tpu_custom_call.1} parent=5 // pred_check_branch
        %221 = sbr.rel (%p218) target = $region32
      $region31: #{tpu_custom_call.1} parent=5 // pred_region
        %s222 = ssub.s32 %s23, 1
        %s223 = sand.u32 %s36, 1
        %s224 = scalar_lea.sflag [#allocation3], %s223
        %s225 = sand.u32 %s36, 1
        %s226 = smul.addr %s225, 8
        %s227 = scalar_lea.vmem [#allocation2], %s226
        // Predicated region
        $region33: #{tpu_custom_call.1} parent=31 // pred_check
          %p228 = pneg %p49
        $region34: #{tpu_custom_call.1} parent=31 // pred_check_branch
          %230 = sbr.rel (%p228) target = $region36
        $region35: #{tpu_custom_call.1} parent=31 // pred_region
          %231 = dma.done %s224, 128
        $region36: #{tpu_custom_call.1} parent=31 // pred_fallthru
          _
        %s232 = sand.u32 %s28, 1
        %s233 = scalar_lea.sflag [#allocation6], %s232
        %s234 = sand.u32 %s62, 1
        %s235 = smul.addr %s234, 8
        %s236 = scalar_lea.vmem [#allocation5], %s235
        // Predicated region
        $region37: #{tpu_custom_call.1} parent=31 // pred_check
          %p237 = pneg %p75
        $region38: #{tpu_custom_call.1} parent=31 // pred_check_branch
          %239 = sbr.rel (%p237) target = $region40
        $region39: #{tpu_custom_call.1} parent=31 // pred_region
          %240 = dma.done %s233, 128
        $region40: #{tpu_custom_call.1} parent=31 // pred_fallthru
          _
        // Predicated region
        $region41: #{tpu_custom_call.1} parent=31 // pred_check
          %p241 = pneg %p96
        $region42: #{tpu_custom_call.1} parent=31 // pred_check_branch
          %243 = sbr.rel (%p241) target = $region44
        $region43: #{tpu_custom_call.1} parent=31 // pred_region
          %244 = dma.done [#allocation6], 12288
        $region44: #{tpu_custom_call.1} parent=31 // pred_fallthru
          _
        %s245 = sand.u32 %s36, 1
        %s246 = scalar_lea.sflag [#allocation3], %s245
        %s247 = sand.u32 %s36, 1
        %s248 = smul.addr %s247, 8
        %s249 = scalar_lea.vmem [#allocation2], %s248
        %p250 = pneg %p49
        %p251 = pneg %p46
        %s252 = sand.u32 %s28, 1
        %s253 = scalar_lea.sflag [#allocation6], %s252
        %s254 = sand.u32 %s62, 1
        %s255 = smul.addr %s254, 8
        %s256 = scalar_lea.vmem [#allocation5], %s255
        %p257 = pneg %p75
        %p258 = pneg %p72
        %p259 = pneg %p96
        %p260 = pneg %p93
        %p261 = pneg %p122
        %p262 = pneg %p119
        %s263 = sand.u32 %s109, 1
        %s264 = scalar_lea.sflag [#allocation4], %s263
        %s265 = sand.u32 %s109, 1
        %s266 = smul.addr %s265, 8
        %s267 = scalar_lea.vmem [#allocation8], %s266
        %p268 = pneg %p148
        %p269 = pneg %p145
        %s270 = sand.u32 %s135, 1
        %s271 = scalar_lea.sflag [#allocation10], %s270
        %s272 = sand.u32 %s135, 1
        %s273 = smul.addr %s272, 8
        %s274 = scalar_lea.vmem [#allocation9], %s273
        %v276 = vld [vmem:[%s227] sm:$0xff]
        %v277 = vld [vmem:[%s236] sm:$0xff]
        %v278 = vpack.c.bf16 %v277, %v277
        %v279 = vld [vmem:[#allocation7] sm:$0xf]
        %v280 = vld [vmem:[#allocation7 + $0x30] sm:$0xf]
        %v281 = vld [vmem:[#allocation7 + $0x60] sm:$0xf]
        %v282 = vld [vmem:[#allocation7 + $0x90] sm:$0xf]
        %v283 = vld [vmem:[#allocation7 + $0xc0] sm:$0xf]
        %v284 = vld [vmem:[#allocation7 + $0xf0] sm:$0xf]
        %v285 = vld [vmem:[#allocation7 + $0x120] sm:$0xf]
        %v286 = vld [vmem:[#allocation7 + $0x150] sm:$0xf]
        %v287 = vld [vmem:[#allocation7 + $0x180] sm:$0xf]
        %v288 = vld [vmem:[#allocation7 + $0x1b0] sm:$0xf]
        %v289 = vld [vmem:[#allocation7 + $0x1e0] sm:$0xf]
        %v290 = vld [vmem:[#allocation7 + $0x210] sm:$0xf]
        %v291 = vld [vmem:[#allocation7 + $0x240] sm:$0xf]
        %v292 = vld [vmem:[#allocation7 + $0x270] sm:$0xf]
        %v293 = vld [vmem:[#allocation7 + $0x2a0] sm:$0xf]
        %v294 = vld [vmem:[#allocation7 + $0x2d0] sm:$0xf]
        %v311 = vunpack.c.l.b16 %v279
        %v312 = vunpack.c.l.b16 %v280
        %v313 = vunpack.c.l.b16 %v281
        %v314 = vunpack.c.l.b16 %v282
        %v315 = vunpack.c.l.b16 %v283
        %v316 = vunpack.c.l.b16 %v284
        %v317 = vunpack.c.l.b16 %v285
        %v318 = vunpack.c.l.b16 %v286
        %v319 = vunpack.c.l.b16 %v287
        %v320 = vunpack.c.l.b16 %v288
        %v321 = vunpack.c.l.b16 %v289
        %v322 = vunpack.c.l.b16 %v290
        %v323 = vunpack.c.l.b16 %v291
        %v324 = vunpack.c.l.b16 %v292
        %v325 = vunpack.c.l.b16 %v293
        %v326 = vunpack.c.l.b16 %v294
        %v327 = vpack.c.b16 %v312, %v311
        %v328 = vpack.c.b16 %v314, %v313
        %v329 = vpack.c.b16 %v316, %v315
        %v330 = vpack.c.b16 %v318, %v317
        %v331 = vpack.c.b16 %v320, %v319
        %v332 = vpack.c.b16 %v322, %v321
        %v333 = vpack.c.b16 %v324, %v323
        %v334 = vpack.c.b16 %v326, %v325
        %343 = vmatprep.subr.bf16.mxu0 0
        %344 = vmatpush1.bf16.msra.mxu0 %v327
        %345 = vmatprep.subr.bf16.mxu0 0
        %346 = vmatpush1.bf16.msra.mxu0 %v328
        %347 = vmatprep.subr.bf16.mxu0 0
        %348 = vmatpush1.bf16.msra.mxu0 %v329
        %349 = vmatprep.subr.bf16.mxu0 0
        %350 = vmatpush1.bf16.msra.mxu0 %v330
        %351 = vmatprep.subr.bf16.mxu0 0
        %352 = vmatpush1.bf16.msra.mxu0 %v331
        %353 = vmatprep.subr.bf16.mxu0 0
        %354 = vmatpush1.bf16.msra.mxu0 %v332
        %355 = vmatprep.subr.bf16.mxu0 0
        %356 = vmatpush1.bf16.msra.mxu0 %v333
        %357 = vmatprep.subr.bf16.mxu0 0
        %358 = vmatpush1.bf16.msra.mxu0 %v334
        %359 = vmatprep.subr.bf16.mxu0 0
        %360 = vmatpush1.bf16.msra.mxu0 0
        %361 = vmatprep.subr.bf16.mxu0 0
        %362 = vmatpush1.bf16.msra.mxu0 0
        %363 = vmatprep.subr.bf16.mxu0 0
        %364 = vmatpush1.bf16.msra.mxu0 0
        %365 = vmatprep.subr.bf16.mxu0 0
        %366 = vmatpush1.bf16.msra.mxu0 0
        %367 = vmatprep.subr.bf16.mxu0 0
        %368 = vmatpush1.bf16.msra.mxu0 0
        %369 = vmatprep.subr.bf16.mxu0 0
        %370 = vmatpush1.bf16.msra.mxu0 0
        %371 = vmatprep.subr.bf16.mxu0 0
        %372 = vmatpush1.bf16.msra.mxu0 0
        %373 = vmatprep.subr.bf16.mxu0 0
        %374 = vmatpush1.bf16.msra.mxu0 0
        %375 = vmatprep.mubr.bf16.mxu0 0
        %376 = vmatmul.mubr.bf16.gmra.mrb[0].mxu0 %v278
        %v377 = vpop.f32.mrb[0].mxu0
        %v378 = vadd.f32 0.0, %v377
        %v379 = vpop.f32.mrb[0].mxu0
        %v380 = vpop.f32.mrb[0].mxu0
        %v381 = vpop.f32.mrb[0].mxu0
        %382 = vdwg.mxu0
        %vm383 = vcmask 64512
        %v385 = vsel %vm383, %v276, 0
        %387 = vmatprep.subr.mxu0 0.0
        %388 = vmatpush1.msra.mxu0 %v378
        %389 = vmatprep.subr.mxu0 0.0
        %390 = vmatpush1.msra.mxu0 0.0
        %391 = vmatprep.subr.mxu0 0.0
        %392 = vmatpush1.msra.mxu0 0.0
        %393 = vmatprep.subr.mxu0 0.0
        %394 = vmatpush1.msra.mxu0 0.0
        %395 = vmatprep.subr.mxu0 0.0
        %396 = vmatpush1.msra.mxu0 0.0
        %397 = vmatprep.subr.mxu0 0.0
        %398 = vmatpush1.msra.mxu0 0.0
        %399 = vmatprep.subr.mxu0 0.0
        %400 = vmatpush1.msra.mxu0 0.0
        %401 = vmatprep.subr.mxu0 0.0
        %402 = vmatpush1.msra.mxu0 0.0
        %403 = vmatprep.subr.mxu0 0.0
        %404 = vmatpush1.msra.mxu0 0.0
        %405 = vmatprep.subr.mxu0 0.0
        %406 = vmatpush1.msra.mxu0 0.0
        %407 = vmatprep.subr.mxu0 0.0
        %408 = vmatpush1.msra.mxu0 0.0
        %409 = vmatprep.subr.mxu0 0.0
        %410 = vmatpush1.msra.mxu0 0.0
        %411 = vmatprep.subr.mxu0 0.0
        %412 = vmatpush1.msra.mxu0 0.0
        %413 = vmatprep.subr.mxu0 0.0
        %414 = vmatpush1.msra.mxu0 0.0
        %415 = vmatprep.subr.mxu0 0.0
        %416 = vmatpush1.msra.mxu0 0.0
        %417 = vmatprep.subr.mxu0 0.0
        %418 = vmatpush1.msra.mxu0 0.0
        %419 = vmatprep.subr.mxu0 0.0
        %420 = vmatpush1.msra.mxu0 0.0
        %421 = vmatprep.subr.mxu0 0.0
        %422 = vmatpush1.msra.mxu0 0.0
        %423 = vmatprep.subr.mxu0 0.0
        %424 = vmatpush1.msra.mxu0 0.0
        %425 = vmatprep.subr.mxu0 0.0
        %426 = vmatpush1.msra.mxu0 0.0
        %427 = vmatprep.subr.mxu0 0.0
        %428 = vmatpush1.msra.mxu0 0.0
        %429 = vmatprep.subr.mxu0 0.0
        %430 = vmatpush1.msra.mxu0 0.0
        %431 = vmatprep.subr.mxu0 0.0
        %432 = vmatpush1.msra.mxu0 0.0
        %433 = vmatprep.subr.mxu0 0.0
        %434 = vmatpush1.msra.mxu0 0.0
        %435 = vmatprep.subr.mxu0 0.0
        %436 = vmatpush1.msra.mxu0 0.0
        %437 = vmatprep.subr.mxu0 0.0
        %438 = vmatpush1.msra.mxu0 0.0
        %439 = vmatprep.subr.mxu0 0.0
        %440 = vmatpush1.msra.mxu0 0.0
        %441 = vmatprep.subr.mxu0 0.0
        %442 = vmatpush1.msra.mxu0 0.0
        %443 = vmatprep.subr.mxu0 0.0
        %444 = vmatpush1.msra.mxu0 0.0
        %445 = vmatprep.subr.mxu0 0.0
        %446 = vmatpush1.msra.mxu0 0.0
        %447 = vmatprep.subr.mxu0 0.0
        %448 = vmatpush1.msra.mxu0 0.0
        %449 = vmatprep.subr.mxu0 0.0
        %450 = vmatpush1.msra.mxu0 0.0
        %451 = vmatprep.mubr.f32.mxu0 0.0
        %452 = vmatmul.mubr.f32.gmra.mrb[0].mxu0 %v385
        %v453 = vpop.f32.mrb[0].mxu0
        %v454 = vadd.f32 0.0, %v453
        %v455 = vpop.f32.mrb[0].mxu0
        %456 = vdwg.mxu0
        %v457 = vmax.f32 %v454, 0.0
        %v458 = vpack.c.bf16 %v457, %v457
        %v459 = vld [vmem:[#allocation7 + $0x4] sm:$0xf]
        %v460 = vld [vmem:[#allocation7 + $0x34] sm:$0xf]
        %v461 = vld [vmem:[#allocation7 + $0x64] sm:$0xf]
        %v462 = vld [vmem:[#allocation7 + $0x94] sm:$0xf]
        %v463 = vld [vmem:[#allocation7 + $0xc4] sm:$0xf]
        %v464 = vld [vmem:[#allocation7 + $0xf4] sm:$0xf]
        %v465 = vld [vmem:[#allocation7 + $0x124] sm:$0xf]
        %v466 = vld [vmem:[#allocation7 + $0x154] sm:$0xf]
        %v467 = vld [vmem:[#allocation7 + $0x184] sm:$0xf]
        %v468 = vld [vmem:[#allocation7 + $0x1b4] sm:$0xf]
        %v469 = vld [vmem:[#allocation7 + $0x1e4] sm:$0xf]
        %v470 = vld [vmem:[#allocation7 + $0x214] sm:$0xf]
        %v471 = vld [vmem:[#allocation7 + $0x244] sm:$0xf]
        %v472 = vld [vmem:[#allocation7 + $0x274] sm:$0xf]
        %v473 = vld [vmem:[#allocation7 + $0x2a4] sm:$0xf]
        %v474 = vld [vmem:[#allocation7 + $0x2d4] sm:$0xf]
        %v491 = vunpack.c.l.b16 %v459
        %v492 = vunpack.c.l.b16 %v460
        %v493 = vunpack.c.l.b16 %v461
        %v494 = vunpack.c.l.b16 %v462
        %v495 = vunpack.c.l.b16 %v463
        %v496 = vunpack.c.l.b16 %v464
        %v497 = vunpack.c.l.b16 %v465
        %v498 = vunpack.c.l.b16 %v466
        %v499 = vunpack.c.l.b16 %v467
        %v500 = vunpack.c.l.b16 %v468
        %v501 = vunpack.c.l.b16 %v469
        %v502 = vunpack.c.l.b16 %v470
        %v503 = vunpack.c.l.b16 %v471
        %v504 = vunpack.c.l.b16 %v472
        %v505 = vunpack.c.l.b16 %v473
        %v506 = vunpack.c.l.b16 %v474
        %v507 = vpack.c.b16 %v492, %v491
        %v508 = vpack.c.b16 %v494, %v493
        %v509 = vpack.c.b16 %v496, %v495
        %v510 = vpack.c.b16 %v498, %v497
        %v511 = vpack.c.b16 %v500, %v499
        %v512 = vpack.c.b16 %v502, %v501
        %v513 = vpack.c.b16 %v504, %v503
        %v514 = vpack.c.b16 %v506, %v505
        %523 = vmatprep.subr.bf16.mxu0 0
        %524 = vmatpush1.bf16.msra.mxu0 %v507
        %525 = vmatprep.subr.bf16.mxu0 0
        %526 = vmatpush1.bf16.msra.mxu0 %v508
        %527 = vmatprep.subr.bf16.mxu0 0
        %528 = vmatpush1.bf16.msra.mxu0 %v509
        %529 = vmatprep.subr.bf16.mxu0 0
        %530 = vmatpush1.bf16.msra.mxu0 %v510
        %531 = vmatprep.subr.bf16.mxu0 0
        %532 = vmatpush1.bf16.msra.mxu0 %v511
        %533 = vmatprep.subr.bf16.mxu0 0
        %534 = vmatpush1.bf16.msra.mxu0 %v512
        %535 = vmatprep.subr.bf16.mxu0 0
        %536 = vmatpush1.bf16.msra.mxu0 %v513
        %537 = vmatprep.subr.bf16.mxu0 0
        %538 = vmatpush1.bf16.msra.mxu0 %v514
        %539 = vmatprep.subr.bf16.mxu0 0
        %540 = vmatpush1.bf16.msra.mxu0 0
        %541 = vmatprep.subr.bf16.mxu0 0
        %542 = vmatpush1.bf16.msra.mxu0 0
        %543 = vmatprep.subr.bf16.mxu0 0
        %544 = vmatpush1.bf16.msra.mxu0 0
        %545 = vmatprep.subr.bf16.mxu0 0
        %546 = vmatpush1.bf16.msra.mxu0 0
        %547 = vmatprep.subr.bf16.mxu0 0
        %548 = vmatpush1.bf16.msra.mxu0 0
        %549 = vmatprep.subr.bf16.mxu0 0
        %550 = vmatpush1.bf16.msra.mxu0 0
        %551 = vmatprep.subr.bf16.mxu0 0
        %552 = vmatpush1.bf16.msra.mxu0 0
        %553 = vmatprep.subr.bf16.mxu0 0
        %554 = vmatpush1.bf16.msra.mxu0 0
        %555 = vmatprep.mubr.bf16.mxu0 0
        %556 = vmatmul.mubr.bf16.gmra.mrb[0].mxu0 %v458
        %v557 = vpop.f32.mrb[0].mxu0
        %v558 = vadd.f32 0.0, %v557
        %v559 = vpop.f32.mrb[0].mxu0
        %v560 = vpop.f32.mrb[0].mxu0
        %v561 = vpop.f32.mrb[0].mxu0
        %562 = vdwg.mxu0
        %563 = vmatprep.subr.mxu0 0.0
        %564 = vmatpush1.msra.mxu0 %v558
        %565 = vmatprep.subr.mxu0 0.0
        %566 = vmatpush1.msra.mxu0 0.0
        %567 = vmatprep.subr.mxu0 0.0
        %568 = vmatpush1.msra.mxu0 0.0
        %569 = vmatprep.subr.mxu0 0.0
        %570 = vmatpush1.msra.mxu0 0.0
        %571 = vmatprep.subr.mxu0 0.0
        %572 = vmatpush1.msra.mxu0 0.0
        %573 = vmatprep.subr.mxu0 0.0
        %574 = vmatpush1.msra.mxu0 0.0
        %575 = vmatprep.subr.mxu0 0.0
        %576 = vmatpush1.msra.mxu0 0.0
        %577 = vmatprep.subr.mxu0 0.0
        %578 = vmatpush1.msra.mxu0 0.0
        %579 = vmatprep.subr.mxu0 0.0
        %580 = vmatpush1.msra.mxu0 0.0
        %581 = vmatprep.subr.mxu0 0.0
        %582 = vmatpush1.msra.mxu0 0.0
        %583 = vmatprep.subr.mxu0 0.0
        %584 = vmatpush1.msra.mxu0 0.0
        %585 = vmatprep.subr.mxu0 0.0
        %586 = vmatpush1.msra.mxu0 0.0
        %587 = vmatprep.subr.mxu0 0.0
        %588 = vmatpush1.msra.mxu0 0.0
        %589 = vmatprep.subr.mxu0 0.0
        %590 = vmatpush1.msra.mxu0 0.0
        %591 = vmatprep.subr.mxu0 0.0
        %592 = vmatpush1.msra.mxu0 0.0
        %593 = vmatprep.subr.mxu0 0.0
        %594 = vmatpush1.msra.mxu0 0.0
        %595 = vmatprep.subr.mxu0 0.0
        %596 = vmatpush1.msra.mxu0 0.0
        %597 = vmatprep.subr.mxu0 0.0
        %598 = vmatpush1.msra.mxu0 0.0
        %599 = vmatprep.subr.mxu0 0.0
        %600 = vmatpush1.msra.mxu0 0.0
        %601 = vmatprep.subr.mxu0 0.0
        %602 = vmatpush1.msra.mxu0 0.0
        %603 = vmatprep.subr.mxu0 0.0
        %604 = vmatpush1.msra.mxu0 0.0
        %605 = vmatprep.subr.mxu0 0.0
        %606 = vmatpush1.msra.mxu0 0.0
        %607 = vmatprep.subr.mxu0 0.0
        %608 = vmatpush1.msra.mxu0 0.0
        %609 = vmatprep.subr.mxu0 0.0
        %610 = vmatpush1.msra.mxu0 0.0
        %611 = vmatprep.subr.mxu0 0.0
        %612 = vmatpush1.msra.mxu0 0.0
        %613 = vmatprep.subr.mxu0 0.0
        %614 = vmatpush1.msra.mxu0 0.0
        %615 = vmatprep.subr.mxu0 0.0
        %616 = vmatpush1.msra.mxu0 0.0
        %617 = vmatprep.subr.mxu0 0.0
        %618 = vmatpush1.msra.mxu0 0.0
        %619 = vmatprep.subr.mxu0 0.0
        %620 = vmatpush1.msra.mxu0 0.0
        %621 = vmatprep.subr.mxu0 0.0
        %622 = vmatpush1.msra.mxu0 0.0
        %623 = vmatprep.subr.mxu0 0.0
        %624 = vmatpush1.msra.mxu0 0.0
        %625 = vmatprep.subr.mxu0 0.0
        %626 = vmatpush1.msra.mxu0 0.0
        %627 = vmatprep.mubr.f32.mxu0 0.0
        %628 = vmatmul.mubr.f32.gmra.mrb[0].mxu0 %v385
        %v629 = vpop.f32.mrb[0].mxu0
        %v630 = vadd.f32 0.0, %v629
        %v631 = vpop.f32.mrb[0].mxu0
        %632 = vdwg.mxu0
        %v633 = vmax.f32 %v630, 0.0
        %v634 = vpack.c.bf16 %v633, %v633
        %v635 = vld [vmem:[#allocation7 + $0x8] sm:$0xff]
        %v636 = vld [vmem:[#allocation7 + $0x10] sm:$0xf]
        %v637 = vld [vmem:[#allocation7 + $0x38] sm:$0xff]
        %v638 = vld [vmem:[#allocation7 + $0x40] sm:$0xf]
        %v639 = vld [vmem:[#allocation7 + $0x68] sm:$0xff]
        %v640 = vld [vmem:[#allocation7 + $0x70] sm:$0xf]
        %v641 = vld [vmem:[#allocation7 + $0x98] sm:$0xff]
        %v642 = vld [vmem:[#allocation7 + $0xa0] sm:$0xf]
        %v643 = vld [vmem:[#allocation7 + $0xc8] sm:$0xff]
        %v644 = vld [vmem:[#allocation7 + $0xd0] sm:$0xf]
        %v645 = vld [vmem:[#allocation7 + $0xf8] sm:$0xff]
        %v646 = vld [vmem:[#allocation7 + $0x100] sm:$0xf]
        %v647 = vld [vmem:[#allocation7 + $0x128] sm:$0xff]
        %v648 = vld [vmem:[#allocation7 + $0x130] sm:$0xf]
        %v649 = vld [vmem:[#allocation7 + $0x158] sm:$0xff]
        %v650 = vld [vmem:[#allocation7 + $0x160] sm:$0xf]
        %v651 = vld [vmem:[#allocation7 + $0x188] sm:$0xff]
        %v652 = vld [vmem:[#allocation7 + $0x190] sm:$0xf]
        %v653 = vld [vmem:[#allocation7 + $0x1b8] sm:$0xff]
        %v654 = vld [vmem:[#allocation7 + $0x1c0] sm:$0xf]
        %v655 = vld [vmem:[#allocation7 + $0x1e8] sm:$0xff]
        %v656 = vld [vmem:[#allocation7 + $0x1f0] sm:$0xf]
        %v657 = vld [vmem:[#allocation7 + $0x218] sm:$0xff]
        %v658 = vld [vmem:[#allocation7 + $0x220] sm:$0xf]
        %v659 = vld [vmem:[#allocation7 + $0x248] sm:$0xff]
        %v660 = vld [vmem:[#allocation7 + $0x250] sm:$0xf]
        %v661 = vld [vmem:[#allocation7 + $0x278] sm:$0xff]
        %v662 = vld [vmem:[#allocation7 + $0x280] sm:$0xf]
        %v663 = vld [vmem:[#allocation7 + $0x2a8] sm:$0xff]
        %v664 = vld [vmem:[#allocation7 + $0x2b0] sm:$0xf]
        %v665 = vld [vmem:[#allocation7 + $0x2d8] sm:$0xff]
        %v666 = vld [vmem:[#allocation7 + $0x2e0] sm:$0xf]
        %v699 = vunpack.c.l.b16 %v635
        %v700 = vunpack.c.h.b16 %v635
        %v701 = vunpack.c.l.b16 %v636
        %v702 = vunpack.c.l.b16 %v637
        %v703 = vunpack.c.h.b16 %v637
        %v704 = vunpack.c.l.b16 %v638
        %v705 = vunpack.c.l.b16 %v639
        %v706 = vunpack.c.h.b16 %v639
        %v707 = vunpack.c.l.b16 %v640
        %v708 = vunpack.c.l.b16 %v641
        %v709 = vunpack.c.h.b16 %v641
        %v710 = vunpack.c.l.b16 %v642
        %v711 = vunpack.c.l.b16 %v643
        %v712 = vunpack.c.h.b16 %v643
        %v713 = vunpack.c.l.b16 %v644
        %v714 = vunpack.c.l.b16 %v645
        %v715 = vunpack.c.h.b16 %v645
        %v716 = vunpack.c.l.b16 %v646
        %v717 = vunpack.c.l.b16 %v647
        %v718 = vunpack.c.h.b16 %v647
        %v719 = vunpack.c.l.b16 %v648
        %v720 = vunpack.c.l.b16 %v649
        %v721 = vunpack.c.h.b16 %v649
        %v722 = vunpack.c.l.b16 %v650
        %v723 = vunpack.c.l.b16 %v651
        %v724 = vunpack.c.h.b16 %v651
        %v725 = vunpack.c.l.b16 %v652
        %v726 = vunpack.c.l.b16 %v653
        %v727 = vunpack.c.h.b16 %v653
        %v728 = vunpack.c.l.b16 %v654
        %v729 = vunpack.c.l.b16 %v655
        %v730 = vunpack.c.h.b16 %v655
        %v731 = vunpack.c.l.b16 %v656
        %v732 = vunpack.c.l.b16 %v657
        %v733 = vunpack.c.h.b16 %v657
        %v734 = vunpack.c.l.b16 %v658
        %v735 = vunpack.c.l.b16 %v659
        %v736 = vunpack.c.h.b16 %v659
        %v737 = vunpack.c.l.b16 %v660
        %v738 = vunpack.c.l.b16 %v661
        %v739 = vunpack.c.h.b16 %v661
        %v740 = vunpack.c.l.b16 %v662
        %v741 = vunpack.c.l.b16 %v663
        %v742 = vunpack.c.h.b16 %v663
        %v743 = vunpack.c.l.b16 %v664
        %v744 = vunpack.c.l.b16 %v665
        %v745 = vunpack.c.h.b16 %v665
        %v746 = vunpack.c.l.b16 %v666
        %v747 = vpack.c.b16 %v702, %v699
        %v748 = vpack.c.b16 %v703, %v700
        %v749 = vpack.c.b16 %v704, %v701
        %v750 = vpack.c.b16 %v708, %v705
        %v751 = vpack.c.b16 %v709, %v706
        %v752 = vpack.c.b16 %v710, %v707
        %v753 = vpack.c.b16 %v714, %v711
        %v754 = vpack.c.b16 %v715, %v712
        %v755 = vpack.c.b16 %v716, %v713
        %v756 = vpack.c.b16 %v720, %v717
        %v757 = vpack.c.b16 %v721, %v718
        %v758 = vpack.c.b16 %v722, %v719
        %v759 = vpack.c.b16 %v726, %v723
        %v760 = vpack.c.b16 %v727, %v724
        %v761 = vpack.c.b16 %v728, %v725
        %v762 = vpack.c.b16 %v732, %v729
        %v763 = vpack.c.b16 %v733, %v730
        %v764 = vpack.c.b16 %v734, %v731
        %v765 = vpack.c.b16 %v738, %v735
        %v766 = vpack.c.b16 %v739, %v736
        %v767 = vpack.c.b16 %v740, %v737
        %v768 = vpack.c.b16 %v744, %v741
        %v769 = vpack.c.b16 %v745, %v742
        %v770 = vpack.c.b16 %v746, %v743
        %795 = vmatprep.subr.bf16.mxu0 %v748
        %796 = vmatpush1.bf16.msra.mxu0 %v747
        %797 = vmatprep.subr.bf16.mxu0 %v751
        %798 = vmatpush1.bf16.msra.mxu0 %v750
        %799 = vmatprep.subr.bf16.mxu0 %v754
        %800 = vmatpush1.bf16.msra.mxu0 %v753
        %801 = vmatprep.subr.bf16.mxu0 %v757
        %802 = vmatpush1.bf16.msra.mxu0 %v756
        %803 = vmatprep.subr.bf16.mxu0 %v760
        %804 = vmatpush1.bf16.msra.mxu0 %v759
        %805 = vmatprep.subr.bf16.mxu0 %v763
        %806 = vmatpush1.bf16.msra.mxu0 %v762
        %807 = vmatprep.subr.bf16.mxu0 %v766
        %808 = vmatpush1.bf16.msra.mxu0 %v765
        %809 = vmatprep.subr.bf16.mxu0 %v769
        %810 = vmatpush1.bf16.msra.mxu0 %v768
        %811 = vmatprep.subr.bf16.mxu0 0
        %812 = vmatpush1.bf16.msra.mxu0 0
        %813 = vmatprep.subr.bf16.mxu0 0
        %814 = vmatpush1.bf16.msra.mxu0 0
        %815 = vmatprep.subr.bf16.mxu0 0
        %816 = vmatpush1.bf16.msra.mxu0 0
        %817 = vmatprep.subr.bf16.mxu0 0
        %818 = vmatpush1.bf16.msra.mxu0 0
        %819 = vmatprep.subr.bf16.mxu0 0
        %820 = vmatpush1.bf16.msra.mxu0 0
        %821 = vmatprep.subr.bf16.mxu0 0
        %822 = vmatpush1.bf16.msra.mxu0 0
        %823 = vmatprep.subr.bf16.mxu0 0
        %824 = vmatpush1.bf16.msra.mxu0 0
        %825 = vmatprep.subr.bf16.mxu0 0
        %826 = vmatpush1.bf16.msra.mxu0 0
        %827 = vmatprep.mubr.bf16.mxu0 0
        %828 = vmatmul.mubr.bf16.gmra.mrb[0].mxu0 %v634
        %v829 = vpop.f32.mrb[0].mxu0
        %v830 = vadd.f32 0.0, %v829
        %v831 = vpop.f32.mrb[0].mxu0
        %v832 = vadd.f32 0.0, %v831
        %v833 = vpop.f32.mrb[0].mxu0
        %v834 = vpop.f32.mrb[0].mxu0
        %835 = vdwg.mxu0
        %836 = vmatprep.subr.bf16.mxu0 0
        %837 = vmatpush1.bf16.msra.mxu0 %v749
        %838 = vmatprep.subr.bf16.mxu0 0
        %839 = vmatpush1.bf16.msra.mxu0 %v752
        %840 = vmatprep.subr.bf16.mxu0 0
        %841 = vmatpush1.bf16.msra.mxu0 %v755
        %842 = vmatprep.subr.bf16.mxu0 0
        %843 = vmatpush1.bf16.msra.mxu0 %v758
        %844 = vmatprep.subr.bf16.mxu0 0
        %845 = vmatpush1.bf16.msra.mxu0 %v761
        %846 = vmatprep.subr.bf16.mxu0 0
        %847 = vmatpush1.bf16.msra.mxu0 %v764
        %848 = vmatprep.subr.bf16.mxu0 0
        %849 = vmatpush1.bf16.msra.mxu0 %v767
        %850 = vmatprep.subr.bf16.mxu0 0
        %851 = vmatpush1.bf16.msra.mxu0 %v770
        %852 = vmatprep.subr.bf16.mxu0 0
        %853 = vmatpush1.bf16.msra.mxu0 0
        %854 = vmatprep.subr.bf16.mxu0 0
        %855 = vmatpush1.bf16.msra.mxu0 0
        %856 = vmatprep.subr.bf16.mxu0 0
        %857 = vmatpush1.bf16.msra.mxu0 0
        %858 = vmatprep.subr.bf16.mxu0 0
        %859 = vmatpush1.bf16.msra.mxu0 0
        %860 = vmatprep.subr.bf16.mxu0 0
        %861 = vmatpush1.bf16.msra.mxu0 0
        %862 = vmatprep.subr.bf16.mxu0 0
        %863 = vmatpush1.bf16.msra.mxu0 0
        %864 = vmatprep.subr.bf16.mxu0 0
        %865 = vmatpush1.bf16.msra.mxu0 0
        %866 = vmatprep.subr.bf16.mxu0 0
        %867 = vmatpush1.bf16.msra.mxu0 0
        %868 = vmatprep.mubr.bf16.mxu0 0
        %869 = vmatmul.mubr.bf16.gmra.mrb[0].mxu0 %v634
        %v870 = vpop.f32.mrb[0].mxu0
        %v871 = vadd.f32 0.0, %v870
        %v872 = vpop.f32.mrb[0].mxu0
        %v873 = vpop.f32.mrb[0].mxu0
        %v874 = vpop.f32.mrb[0].mxu0
        %875 = vdwg.mxu0
        %876 = vmatprep.subr.mxu0 0.0
        %877 = vmatpush1.xpose.msra.mxu0 %v832
        %878 = vmatprep.subr.mxu0 0.0
        %879 = vmatpush1.xpose.msra.mxu0 0.0
        %880 = vmatprep.subr.mxu0 0.0
        %881 = vmatpush1.xpose.msra.mxu0 0.0
        %882 = vmatprep.subr.mxu0 0.0
        %883 = vmatpush1.xpose.msra.mxu0 0.0
        %884 = vmatprep.subr.mxu0 0.0
        %885 = vmatpush1.xpose.msra.mxu0 0.0
        %886 = vmatprep.subr.mxu0 0.0
        %887 = vmatpush1.xpose.msra.mxu0 0.0
        %888 = vmatprep.subr.mxu0 0.0
        %889 = vmatpush1.xpose.msra.mxu0 0.0
        %890 = vmatprep.subr.mxu0 0.0
        %891 = vmatpush1.xpose.msra.mxu0 0.0
        %892 = vmatprep.subr.mxu0 0.0
        %893 = vmatpush1.xpose.msra.mxu0 0.0
        %894 = vmatprep.subr.mxu0 0.0
        %895 = vmatpush1.xpose.msra.mxu0 0.0
        %896 = vmatprep.subr.mxu0 0.0
        %897 = vmatpush1.xpose.msra.mxu0 0.0
        %898 = vmatprep.subr.mxu0 0.0
        %899 = vmatpush1.xpose.msra.mxu0 0.0
        %900 = vmatprep.subr.mxu0 0.0
        %901 = vmatpush1.xpose.msra.mxu0 0.0
        %902 = vmatprep.subr.mxu0 0.0
        %903 = vmatpush1.xpose.msra.mxu0 0.0
        %904 = vmatprep.subr.mxu0 0.0
        %905 = vmatpush1.xpose.msra.mxu0 0.0
        %906 = vmatprep.subr.mxu0 0.0
        %907 = vmatpush1.xpose.msra.mxu0 0.0
        %908 = vmatprep.subr.mxu0 0.0
        %909 = vmatpush1.xpose.msra.mxu0 0.0
        %910 = vmatprep.subr.mxu0 0.0
        %911 = vmatpush1.xpose.msra.mxu0 0.0
        %912 = vmatprep.subr.mxu0 0.0
        %913 = vmatpush1.xpose.msra.mxu0 0.0
        %914 = vmatprep.subr.mxu0 0.0
        %915 = vmatpush1.xpose.msra.mxu0 0.0
        %916 = vmatprep.subr.mxu0 0.0
        %917 = vmatpush1.xpose.msra.mxu0 0.0
        %918 = vmatprep.subr.mxu0 0.0
        %919 = vmatpush1.xpose.msra.mxu0 0.0
        %920 = vmatprep.subr.mxu0 0.0
        %921 = vmatpush1.xpose.msra.mxu0 0.0
        %922 = vmatprep.subr.mxu0 0.0
        %923 = vmatpush1.xpose.msra.mxu0 0.0
        %924 = vmatprep.subr.mxu0 0.0
        %925 = vmatpush1.xpose.msra.mxu0 0.0
        %926 = vmatprep.subr.mxu0 0.0
        %927 = vmatpush1.xpose.msra.mxu0 0.0
        %928 = vmatprep.subr.mxu0 0.0
        %929 = vmatpush1.xpose.msra.mxu0 0.0
        %930 = vmatprep.subr.mxu0 0.0
        %931 = vmatpush1.xpose.msra.mxu0 0.0
        %932 = vmatprep.subr.mxu0 0.0
        %933 = vmatpush1.xpose.msra.mxu0 0.0
        %934 = vmatprep.subr.mxu0 0.0
        %935 = vmatpush1.xpose.msra.mxu0 0.0
        %936 = vmatprep.subr.mxu0 0.0
        %937 = vmatpush1.xpose.msra.mxu0 0.0
        %938 = vmatprep.subr.mxu0 0.0
        %939 = vmatpush1.xpose.msra.mxu0 0.0
        %940 = vmatprep.mubr.f32.mxu0 0.0
        %941 = vmatmul.mubr.f32.gmra.mrb[0].mxu0 %v830
        %v942 = vpop.f32.mrb[0].mxu0
        %v943 = vadd.f32 0.0, %v942
        %v944 = vpop.f32.mrb[0].mxu0
        %945 = vdwg.mxu0
        %v946 = vsel %vm383, %v943, -inf
        %947 = vmax.xlane.f32.xlu0 %v946
        %v948 = vpop.xlane.xlu0 %947
        %v949 = vsub.f32 %v943, %v948
        %v950 = vmul.f32 %v949, 1.442695
        %v951 = vpow.pop %v950
        %v952 = vsel %vm383, %v951, 0.0
        %953 = vadd.xlane.f32.xlu0 %v952
        %v954 = vpop.xlane.xlu0 %953
        %v955 = vrcp.pop %v954
        %v956 = vmul.f32 %v951, %v955
        %v958 = vsel %vm383, %v956, 0
        %960 = vmatprep.subr.mxu0 0.0
        %961 = vmatpush1.msra.mxu0 %v871
        %962 = vmatprep.subr.mxu0 0.0
        %963 = vmatpush1.msra.mxu0 0.0
        %964 = vmatprep.subr.mxu0 0.0
        %965 = vmatpush1.msra.mxu0 0.0
        %966 = vmatprep.subr.mxu0 0.0
        %967 = vmatpush1.msra.mxu0 0.0
        %968 = vmatprep.subr.mxu0 0.0
        %969 = vmatpush1.msra.mxu0 0.0
        %970 = vmatprep.subr.mxu0 0.0
        %971 = vmatpush1.msra.mxu0 0.0
        %972 = vmatprep.subr.mxu0 0.0
        %973 = vmatpush1.msra.mxu0 0.0
        %974 = vmatprep.subr.mxu0 0.0
        %975 = vmatpush1.msra.mxu0 0.0
        %976 = vmatprep.subr.mxu0 0.0
        %977 = vmatpush1.msra.mxu0 0.0
        %978 = vmatprep.subr.mxu0 0.0
        %979 = vmatpush1.msra.mxu0 0.0
        %980 = vmatprep.subr.mxu0 0.0
        %981 = vmatpush1.msra.mxu0 0.0
        %982 = vmatprep.subr.mxu0 0.0
        %983 = vmatpush1.msra.mxu0 0.0
        %984 = vmatprep.subr.mxu0 0.0
        %985 = vmatpush1.msra.mxu0 0.0
        %986 = vmatprep.subr.mxu0 0.0
        %987 = vmatpush1.msra.mxu0 0.0
        %988 = vmatprep.subr.mxu0 0.0
        %989 = vmatpush1.msra.mxu0 0.0
        %990 = vmatprep.subr.mxu0 0.0
        %991 = vmatpush1.msra.mxu0 0.0
        %992 = vmatprep.subr.mxu0 0.0
        %993 = vmatpush1.msra.mxu0 0.0
        %994 = vmatprep.subr.mxu0 0.0
        %995 = vmatpush1.msra.mxu0 0.0
        %996 = vmatprep.subr.mxu0 0.0
        %997 = vmatpush1.msra.mxu0 0.0
        %998 = vmatprep.subr.mxu0 0.0
        %999 = vmatpush1.msra.mxu0 0.0
        %1000 = vmatprep.subr.mxu0 0.0
        %1001 = vmatpush1.msra.mxu0 0.0
        %1002 = vmatprep.subr.mxu0 0.0
        %1003 = vmatpush1.msra.mxu0 0.0
        %1004 = vmatprep.subr.mxu0 0.0
        %1005 = vmatpush1.msra.mxu0 0.0
        %1006 = vmatprep.subr.mxu0 0.0
        %1007 = vmatpush1.msra.mxu0 0.0
        %1008 = vmatprep.subr.mxu0 0.0
        %1009 = vmatpush1.msra.mxu0 0.0
        %1010 = vmatprep.subr.mxu0 0.0
        %1011 = vmatpush1.msra.mxu0 0.0
        %1012 = vmatprep.subr.mxu0 0.0
        %1013 = vmatpush1.msra.mxu0 0.0
        %1014 = vmatprep.subr.mxu0 0.0
        %1015 = vmatpush1.msra.mxu0 0.0
        %1016 = vmatprep.subr.mxu0 0.0
        %1017 = vmatpush1.msra.mxu0 0.0
        %1018 = vmatprep.subr.mxu0 0.0
        %1019 = vmatpush1.msra.mxu0 0.0
        %1020 = vmatprep.subr.mxu0 0.0
        %1021 = vmatpush1.msra.mxu0 0.0
        %1022 = vmatprep.subr.mxu0 0.0
        %1023 = vmatpush1.msra.mxu0 0.0
        %1024 = vmatprep.mubr.f32.mxu0 0.0
        %1025 = vmatmul.mubr.f32.gmra.mrb[0].mxu0 %v958
        %v1026 = vpop.f32.mrb[0].mxu0
        %v1027 = vadd.f32 0.0, %v1026
        %v1028 = vpop.f32.mrb[0].mxu0
        %1029 = vdwg.mxu0
        %v1030 = vpack.c.bf16 %v1027, %v1027
        %v1031 = vld [vmem:[#allocation7 + $0x14] sm:$0xf]
        %v1032 = vld [vmem:[#allocation7 + $0x44] sm:$0xf]
        %v1033 = vld [vmem:[#allocation7 + $0x74] sm:$0xf]
        %v1034 = vld [vmem:[#allocation7 + $0xa4] sm:$0xf]
        %v1035 = vld [vmem:[#allocation7 + $0xd4] sm:$0xf]
        %v1036 = vld [vmem:[#allocation7 + $0x104] sm:$0xf]
        %v1037 = vld [vmem:[#allocation7 + $0x134] sm:$0xf]
        %v1038 = vld [vmem:[#allocation7 + $0x164] sm:$0xf]
        %v1039 = vld [vmem:[#allocation7 + $0x194] sm:$0xf]
        %v1040 = vld [vmem:[#allocation7 + $0x1c4] sm:$0xf]
        %v1041 = vld [vmem:[#allocation7 + $0x1f4] sm:$0xf]
        %v1042 = vld [vmem:[#allocation7 + $0x224] sm:$0xf]
        %v1043 = vld [vmem:[#allocation7 + $0x254] sm:$0xf]
        %v1044 = vld [vmem:[#allocation7 + $0x284] sm:$0xf]
        %v1045 = vld [vmem:[#allocation7 + $0x2b4] sm:$0xf]
        %v1046 = vld [vmem:[#allocation7 + $0x2e4] sm:$0xf]
        %v1063 = vunpack.c.l.b16 %v1031
        %v1064 = vunpack.c.l.b16 %v1032
        %v1065 = vunpack.c.l.b16 %v1033
        %v1066 = vunpack.c.l.b16 %v1034
        %v1067 = vunpack.c.l.b16 %v1035
        %v1068 = vunpack.c.l.b16 %v1036
        %v1069 = vunpack.c.l.b16 %v1037
        %v1070 = vunpack.c.l.b16 %v1038
        %v1071 = vunpack.c.l.b16 %v1039
        %v1072 = vunpack.c.l.b16 %v1040
        %v1073 = vunpack.c.l.b16 %v1041
        %v1074 = vunpack.c.l.b16 %v1042
        %v1075 = vunpack.c.l.b16 %v1043
        %v1076 = vunpack.c.l.b16 %v1044
        %v1077 = vunpack.c.l.b16 %v1045
        %v1078 = vunpack.c.l.b16 %v1046
        %v1079 = vpack.c.b16 %v1064, %v1063
        %v1080 = vpack.c.b16 %v1066, %v1065
        %v1081 = vpack.c.b16 %v1068, %v1067
        %v1082 = vpack.c.b16 %v1070, %v1069
        %v1083 = vpack.c.b16 %v1072, %v1071
        %v1084 = vpack.c.b16 %v1074, %v1073
        %v1085 = vpack.c.b16 %v1076, %v1075
        %v1086 = vpack.c.b16 %v1078, %v1077
        %1095 = vmatprep.subr.bf16.mxu0 0
        %1096 = vmatpush1.bf16.msra.mxu0 %v1079
        %1097 = vmatprep.subr.bf16.mxu0 0
        %1098 = vmatpush1.bf16.msra.mxu0 %v1080
        %1099 = vmatprep.subr.bf16.mxu0 0
        %1100 = vmatpush1.bf16.msra.mxu0 %v1081
        %1101 = vmatprep.subr.bf16.mxu0 0
        %1102 = vmatpush1.bf16.msra.mxu0 %v1082
        %1103 = vmatprep.subr.bf16.mxu0 0
        %1104 = vmatpush1.bf16.msra.mxu0 %v1083
        %1105 = vmatprep.subr.bf16.mxu0 0
        %1106 = vmatpush1.bf16.msra.mxu0 %v1084
        %1107 = vmatprep.subr.bf16.mxu0 0
        %1108 = vmatpush1.bf16.msra.mxu0 %v1085
        %1109 = vmatprep.subr.bf16.mxu0 0
        %1110 = vmatpush1.bf16.msra.mxu0 %v1086
        %1111 = vmatprep.subr.bf16.mxu0 0
        %1112 = vmatpush1.bf16.msra.mxu0 0
        %1113 = vmatprep.subr.bf16.mxu0 0
        %1114 = vmatpush1.bf16.msra.mxu0 0
        %1115 = vmatprep.subr.bf16.mxu0 0
        %1116 = vmatpush1.bf16.msra.mxu0 0
        %1117 = vmatprep.subr.bf16.mxu0 0
        %1118 = vmatpush1.bf16.msra.mxu0 0
        %1119 = vmatprep.subr.bf16.mxu0 0
        %1120 = vmatpush1.bf16.msra.mxu0 0
        %1121 = vmatprep.subr.bf16.mxu0 0
        %1122 = vmatpush1.bf16.msra.mxu0 0
        %1123 = vmatprep.subr.bf16.mxu0 0
        %1124 = vmatpush1.bf16.msra.mxu0 0
        %1125 = vmatprep.subr.bf16.mxu0 0
        %1126 = vmatpush1.bf16.msra.mxu0 0
        %1127 = vmatprep.mubr.bf16.mxu0 0
        %1128 = vmatmul.mubr.bf16.gmra.mrb[0].mxu0 %v1030
        %v1129 = vpop.f32.mrb[0].mxu0
        %v1130 = vadd.f32 0.0, %v1129
        %v1131 = vpop.f32.mrb[0].mxu0
        %v1132 = vpop.f32.mrb[0].mxu0
        %v1133 = vpop.f32.mrb[0].mxu0
        %1134 = vdwg.mxu0
        %v1135 = vadd.f32 %v633, %v1130
        %1136 = vmatprep.subr.mxu0 0.0
        %1137 = vmatpush1.xpose.msra.mxu0 %v1135
        %1138 = vmatprep.subr.mxu0 0.0
        %1139 = vmatpush1.xpose.msra.mxu0 0.0
        %1140 = vmatprep.subr.mxu0 0.0
        %1141 = vmatpush1.xpose.msra.mxu0 0.0
        %1142 = vmatprep.subr.mxu0 0.0
        %1143 = vmatpush1.xpose.msra.mxu0 0.0
        %1144 = vmatprep.subr.mxu0 0.0
        %1145 = vmatpush1.xpose.msra.mxu0 0.0
        %1146 = vmatprep.subr.mxu0 0.0
        %1147 = vmatpush1.xpose.msra.mxu0 0.0
        %1148 = vmatprep.subr.mxu0 0.0
        %1149 = vmatpush1.xpose.msra.mxu0 0.0
        %1150 = vmatprep.subr.mxu0 0.0
        %1151 = vmatpush1.xpose.msra.mxu0 0.0
        %1152 = vmatprep.subr.mxu0 0.0
        %1153 = vmatpush1.xpose.msra.mxu0 0.0
        %1154 = vmatprep.subr.mxu0 0.0
        %1155 = vmatpush1.xpose.msra.mxu0 0.0
        %1156 = vmatprep.subr.mxu0 0.0
        %1157 = vmatpush1.xpose.msra.mxu0 0.0
        %1158 = vmatprep.subr.mxu0 0.0
        %1159 = vmatpush1.xpose.msra.mxu0 0.0
        %1160 = vmatprep.subr.mxu0 0.0
        %1161 = vmatpush1.xpose.msra.mxu0 0.0
        %1162 = vmatprep.subr.mxu0 0.0
        %1163 = vmatpush1.xpose.msra.mxu0 0.0
        %1164 = vmatprep.subr.mxu0 0.0
        %1165 = vmatpush1.xpose.msra.mxu0 0.0
        %1166 = vmatprep.subr.mxu0 0.0
        %1167 = vmatpush1.xpose.msra.mxu0 0.0
        %1168 = vmatprep.subr.mxu0 0.0
        %1169 = vmatpush1.xpose.msra.mxu0 0.0
        %1170 = vmatprep.subr.mxu0 0.0
        %1171 = vmatpush1.xpose.msra.mxu0 0.0
        %1172 = vmatprep.subr.mxu0 0.0
        %1173 = vmatpush1.xpose.msra.mxu0 0.0
        %1174 = vmatprep.subr.mxu0 0.0
        %1175 = vmatpush1.xpose.msra.mxu0 0.0
        %1176 = vmatprep.subr.mxu0 0.0
        %1177 = vmatpush1.xpose.msra.mxu0 0.0
        %1178 = vmatprep.subr.mxu0 0.0
        %1179 = vmatpush1.xpose.msra.mxu0 0.0
        %1180 = vmatprep.subr.mxu0 0.0
        %1181 = vmatpush1.xpose.msra.mxu0 0.0
        %1182 = vmatprep.subr.mxu0 0.0
        %1183 = vmatpush1.xpose.msra.mxu0 0.0
        %1184 = vmatprep.subr.mxu0 0.0
        %1185 = vmatpush1.xpose.msra.mxu0 0.0
        %1186 = vmatprep.subr.mxu0 0.0
        %1187 = vmatpush1.xpose.msra.mxu0 0.0
        %1188 = vmatprep.subr.mxu0 0.0
        %1189 = vmatpush1.xpose.msra.mxu0 0.0
        %1190 = vmatprep.subr.mxu0 0.0
        %1191 = vmatpush1.xpose.msra.mxu0 0.0
        %1192 = vmatprep.subr.mxu0 0.0
        %1193 = vmatpush1.xpose.msra.mxu0 0.0
        %1194 = vmatprep.subr.mxu0 0.0
        %1195 = vmatpush1.xpose.msra.mxu0 0.0
        %1196 = vmatprep.subr.mxu0 0.0
        %1197 = vmatpush1.xpose.msra.mxu0 0.0
        %1198 = vmatprep.subr.mxu0 0.0
        %1199 = vmatpush1.xpose.msra.mxu0 0.0
        %1200 = vmatprep.mubr.f32.mxu0 0.0
        %1201 = vmatmul.mubr.f32.gmra.mrb[0].mxu0 %v1135
        %v1202 = vpop.f32.mrb[0].mxu0
        %v1203 = vadd.f32 0.0, %v1202
        %v1204 = vpop.f32.mrb[0].mxu0
        %1205 = vdwg.mxu0
        %v1206 = vxor.u32 %v1203, 2147483648
        %v1207 = vmul.f32 %v1206, 1.442695
        %v1208 = vpow.pop %v1207
        %v1209 = vadd.f32 %v1208, 1.0
        %v1210 = vrcp.pop %v1209
        %v1211 = vmul.f32 1.0, %v1210
        %1212 = vst [vmem:[%s274] sm:$0xff] %v1211
        %v1213 = vlaneseq
        %v1214 = vand.u32 %v1213, 127
        %vm1215 = vcmp.eq.s32.totalorder %v1214, 32
        %v1216 = vsel %vm1215, 1.0, %v1135
        %v1217 = vpack.c.bf16 %v1216, %v1216
        %v1218 = vld [vmem:[#allocation7 + $0x18] sm:$0xf]
        %v1219 = vld [vmem:[#allocation7 + $0x48] sm:$0xf]
        %v1220 = vld [vmem:[#allocation7 + $0x78] sm:$0xf]
        %v1221 = vld [vmem:[#allocation7 + $0xa8] sm:$0xf]
        %v1222 = vld [vmem:[#allocation7 + $0xd8] sm:$0xf]
        %v1223 = vld [vmem:[#allocation7 + $0x108] sm:$0xf]
        %v1224 = vld [vmem:[#allocation7 + $0x138] sm:$0xf]
        %v1225 = vld [vmem:[#allocation7 + $0x168] sm:$0xf]
        %v1226 = vld [vmem:[#allocation7 + $0x198] sm:$0xf]
        %v1227 = vld [vmem:[#allocation7 + $0x1c8] sm:$0xf]
        %v1228 = vld [vmem:[#allocation7 + $0x1f8] sm:$0xf]
        %v1229 = vld [vmem:[#allocation7 + $0x228] sm:$0xf]
        %v1230 = vld [vmem:[#allocation7 + $0x258] sm:$0xf]
        %v1231 = vld [vmem:[#allocation7 + $0x288] sm:$0xf]
        %v1232 = vld [vmem:[#allocation7 + $0x2b8] sm:$0xf]
        %v1233 = vld [vmem:[#allocation7 + $0x2e8] sm:$0xf]
        %v1250 = vunpack.c.l.b16 %v1218
        %v1251 = vunpack.c.l.b16 %v1219
        %v1252 = vunpack.c.l.b16 %v1220
        %v1253 = vunpack.c.l.b16 %v1221
        %v1254 = vunpack.c.l.b16 %v1222
        %v1255 = vunpack.c.l.b16 %v1223
        %v1256 = vunpack.c.l.b16 %v1224
        %v1257 = vunpack.c.l.b16 %v1225
        %v1258 = vunpack.c.l.b16 %v1226
        %v1259 = vunpack.c.l.b16 %v1227
        %v1260 = vunpack.c.l.b16 %v1228
        %v1261 = vunpack.c.l.b16 %v1229
        %v1262 = vunpack.c.l.b16 %v1230
        %v1263 = vunpack.c.l.b16 %v1231
        %v1264 = vunpack.c.l.b16 %v1232
        %v1265 = vunpack.c.l.b16 %v1233
        %v1266 = vpack.c.b16 %v1251, %v1250
        %v1267 = vpack.c.b16 %v1253, %v1252
        %v1268 = vpack.c.b16 %v1255, %v1254
        %v1269 = vpack.c.b16 %v1257, %v1256
        %v1270 = vpack.c.b16 %v1259, %v1258
        %v1271 = vpack.c.b16 %v1261, %v1260
        %v1272 = vpack.c.b16 %v1263, %v1262
        %v1273 = vpack.c.b16 %v1265, %v1264
        %1282 = vmatprep.subr.bf16.mxu0 0
        %1283 = vmatpush1.bf16.msra.mxu0 %v1266
        %1284 = vmatprep.subr.bf16.mxu0 0
        %1285 = vmatpush1.bf16.msra.mxu0 %v1267
        %1286 = vmatprep.subr.bf16.mxu0 0
        %1287 = vmatpush1.bf16.msra.mxu0 %v1268
        %1288 = vmatprep.subr.bf16.mxu0 0
        %1289 = vmatpush1.bf16.msra.mxu0 %v1269
        %1290 = vmatprep.subr.bf16.mxu0 0
        %1291 = vmatpush1.bf16.msra.mxu0 %v1270
        %1292 = vmatprep.subr.bf16.mxu0 0
        %1293 = vmatpush1.bf16.msra.mxu0 %v1271
        %1294 = vmatprep.subr.bf16.mxu0 0
        %1295 = vmatpush1.bf16.msra.mxu0 %v1272
        %1296 = vmatprep.subr.bf16.mxu0 0
        %1297 = vmatpush1.bf16.msra.mxu0 %v1273
        %1298 = vmatprep.subr.bf16.mxu0 0
        %1299 = vmatpush1.bf16.msra.mxu0 0
        %1300 = vmatprep.subr.bf16.mxu0 0
        %1301 = vmatpush1.bf16.msra.mxu0 0
        %1302 = vmatprep.subr.bf16.mxu0 0
        %1303 = vmatpush1.bf16.msra.mxu0 0
        %1304 = vmatprep.subr.bf16.mxu0 0
        %1305 = vmatpush1.bf16.msra.mxu0 0
        %1306 = vmatprep.subr.bf16.mxu0 0
        %1307 = vmatpush1.bf16.msra.mxu0 0
        %1308 = vmatprep.subr.bf16.mxu0 0
        %1309 = vmatpush1.bf16.msra.mxu0 0
        %1310 = vmatprep.subr.bf16.mxu0 0
        %1311 = vmatpush1.bf16.msra.mxu0 0
        %1312 = vmatprep.subr.bf16.mxu0 0
        %1313 = vmatpush1.bf16.msra.mxu0 0
        %1314 = vmatprep.mubr.bf16.mxu0 0
        %1315 = vmatmul.mubr.bf16.gmra.mrb[0].mxu0 %v1217
        %v1316 = vpop.f32.mrb[0].mxu0
        %v1317 = vadd.f32 0.0, %v1316
        %v1318 = vpop.f32.mrb[0].mxu0
        %v1319 = vpop.f32.mrb[0].mxu0
        %v1320 = vpop.f32.mrb[0].mxu0
        %1321 = vdwg.mxu0
        %v1322 = vmax.f32 %v1317, 0.0
        %v1323 = vpack.c.bf16 %v1322, %v1322
        %v1324 = vld [vmem:[#allocation7 + $0x1c] sm:$0xf]
        %v1325 = vld [vmem:[#allocation7 + $0x4c] sm:$0xf]
        %v1326 = vld [vmem:[#allocation7 + $0x7c] sm:$0xf]
        %v1327 = vld [vmem:[#allocation7 + $0xac] sm:$0xf]
        %v1328 = vld [vmem:[#allocation7 + $0xdc] sm:$0xf]
        %v1329 = vld [vmem:[#allocation7 + $0x10c] sm:$0xf]
        %v1330 = vld [vmem:[#allocation7 + $0x13c] sm:$0xf]
        %v1331 = vld [vmem:[#allocation7 + $0x16c] sm:$0xf]
        %v1332 = vld [vmem:[#allocation7 + $0x19c] sm:$0xf]
        %v1333 = vld [vmem:[#allocation7 + $0x1cc] sm:$0xf]
        %v1334 = vld [vmem:[#allocation7 + $0x1fc] sm:$0xf]
        %v1335 = vld [vmem:[#allocation7 + $0x22c] sm:$0xf]
        %v1336 = vld [vmem:[#allocation7 + $0x25c] sm:$0xf]
        %v1337 = vld [vmem:[#allocation7 + $0x28c] sm:$0xf]
        %v1338 = vld [vmem:[#allocation7 + $0x2bc] sm:$0xf]
        %v1339 = vld [vmem:[#allocation7 + $0x2ec] sm:$0xf]
        %v1356 = vunpack.c.l.b16 %v1324
        %v1357 = vunpack.c.l.b16 %v1325
        %v1358 = vunpack.c.l.b16 %v1326
        %v1359 = vunpack.c.l.b16 %v1327
        %v1360 = vunpack.c.l.b16 %v1328
        %v1361 = vunpack.c.l.b16 %v1329
        %v1362 = vunpack.c.l.b16 %v1330
        %v1363 = vunpack.c.l.b16 %v1331
        %v1364 = vunpack.c.l.b16 %v1332
        %v1365 = vunpack.c.l.b16 %v1333
        %v1366 = vunpack.c.l.b16 %v1334
        %v1367 = vunpack.c.l.b16 %v1335
        %v1368 = vunpack.c.l.b16 %v1336
        %v1369 = vunpack.c.l.b16 %v1337
        %v1370 = vunpack.c.l.b16 %v1338
        %v1371 = vunpack.c.l.b16 %v1339
        %v1372 = vpack.c.b16 %v1357, %v1356
        %v1373 = vpack.c.b16 %v1359, %v1358
        %v1374 = vpack.c.b16 %v1361, %v1360
        %v1375 = vpack.c.b16 %v1363, %v1362
        %v1376 = vpack.c.b16 %v1365, %v1364
        %v1377 = vpack.c.b16 %v1367, %v1366
        %v1378 = vpack.c.b16 %v1369, %v1368
        %v1379 = vpack.c.b16 %v1371, %v1370
        %1388 = vmatprep.subr.bf16.mxu0 0
        %1389 = vmatpush1.bf16.msra.mxu0 %v1372
        %1390 = vmatprep.subr.bf16.mxu0 0
        %1391 = vmatpush1.bf16.msra.mxu0 %v1373
        %1392 = vmatprep.subr.bf16.mxu0 0
        %1393 = vmatpush1.bf16.msra.mxu0 %v1374
        %1394 = vmatprep.subr.bf16.mxu0 0
        %1395 = vmatpush1.bf16.msra.mxu0 %v1375
        %1396 = vmatprep.subr.bf16.mxu0 0
        %1397 = vmatpush1.bf16.msra.mxu0 %v1376
        %1398 = vmatprep.subr.bf16.mxu0 0
        %1399 = vmatpush1.bf16.msra.mxu0 %v1377
        %1400 = vmatprep.subr.bf16.mxu0 0
        %1401 = vmatpush1.bf16.msra.mxu0 %v1378
        %1402 = vmatprep.subr.bf16.mxu0 0
        %1403 = vmatpush1.bf16.msra.mxu0 %v1379
        %1404 = vmatprep.subr.bf16.mxu0 0
        %1405 = vmatpush1.bf16.msra.mxu0 0
        %1406 = vmatprep.subr.bf16.mxu0 0
        %1407 = vmatpush1.bf16.msra.mxu0 0
        %1408 = vmatprep.subr.bf16.mxu0 0
        %1409 = vmatpush1.bf16.msra.mxu0 0
        %1410 = vmatprep.subr.bf16.mxu0 0
        %1411 = vmatpush1.bf16.msra.mxu0 0
        %1412 = vmatprep.subr.bf16.mxu0 0
        %1413 = vmatpush1.bf16.msra.mxu0 0
        %1414 = vmatprep.subr.bf16.mxu0 0
        %1415 = vmatpush1.bf16.msra.mxu0 0
        %1416 = vmatprep.subr.bf16.mxu0 0
        %1417 = vmatpush1.bf16.msra.mxu0 0
        %1418 = vmatprep.subr.bf16.mxu0 0
        %1419 = vmatpush1.bf16.msra.mxu0 0
        %1420 = vmatprep.mubr.bf16.mxu0 0
        %1421 = vmatmul.mubr.bf16.gmra.mrb[0].mxu0 %v1323
        %v1422 = vpop.f32.mrb[0].mxu0
        %v1423 = vadd.f32 0.0, %v1422
        %v1424 = vpop.f32.mrb[0].mxu0
        %v1425 = vpop.f32.mrb[0].mxu0
        %v1426 = vpop.f32.mrb[0].mxu0
        %1427 = vdwg.mxu0
        %v1428 = vmax.f32 %v1423, 0.0
        %v1429 = vpack.c.bf16 %v1428, %v1428
        %v1430 = vld [vmem:[#allocation7 + $0x20] sm:$0xf]
        %v1431 = vld [vmem:[#allocation7 + $0x50] sm:$0xf]
        %v1432 = vld [vmem:[#allocation7 + $0x80] sm:$0xf]
        %v1433 = vld [vmem:[#allocation7 + $0xb0] sm:$0xf]
        %v1434 = vld [vmem:[#allocation7 + $0xe0] sm:$0xf]
        %v1435 = vld [vmem:[#allocation7 + $0x110] sm:$0xf]
        %v1436 = vld [vmem:[#allocation7 + $0x140] sm:$0xf]
        %v1437 = vld [vmem:[#allocation7 + $0x170] sm:$0xf]
        %v1438 = vld [vmem:[#allocation7 + $0x1a0] sm:$0xf]
        %v1439 = vld [vmem:[#allocation7 + $0x1d0] sm:$0xf]
        %v1440 = vld [vmem:[#allocation7 + $0x200] sm:$0xf]
        %v1441 = vld [vmem:[#allocation7 + $0x230] sm:$0xf]
        %v1442 = vld [vmem:[#allocation7 + $0x260] sm:$0xf]
        %v1443 = vld [vmem:[#allocation7 + $0x290] sm:$0xf]
        %v1444 = vld [vmem:[#allocation7 + $0x2c0] sm:$0xf]
        %v1445 = vld [vmem:[#allocation7 + $0x2f0] sm:$0xf]
        %v1462 = vunpack.c.l.b16 %v1430
        %v1463 = vunpack.c.l.b16 %v1431
        %v1464 = vunpack.c.l.b16 %v1432
        %v1465 = vunpack.c.l.b16 %v1433
        %v1466 = vunpack.c.l.b16 %v1434
        %v1467 = vunpack.c.l.b16 %v1435
        %v1468 = vunpack.c.l.b16 %v1436
        %v1469 = vunpack.c.l.b16 %v1437
        %v1470 = vunpack.c.l.b16 %v1438
        %v1471 = vunpack.c.l.b16 %v1439
        %v1472 = vunpack.c.l.b16 %v1440
        %v1473 = vunpack.c.l.b16 %v1441
        %v1474 = vunpack.c.l.b16 %v1442
        %v1475 = vunpack.c.l.b16 %v1443
        %v1476 = vunpack.c.l.b16 %v1444
        %v1477 = vunpack.c.l.b16 %v1445
        %v1478 = vpack.c.b16 %v1463, %v1462
        %v1479 = vpack.c.b16 %v1465, %v1464
        %v1480 = vpack.c.b16 %v1467, %v1466
        %v1481 = vpack.c.b16 %v1469, %v1468
        %v1482 = vpack.c.b16 %v1471, %v1470
        %v1483 = vpack.c.b16 %v1473, %v1472
        %v1484 = vpack.c.b16 %v1475, %v1474
        %v1485 = vpack.c.b16 %v1477, %v1476
        %1494 = vmatprep.subr.bf16.mxu0 0
        %1495 = vmatpush1.bf16.msra.mxu0 %v1478
        %1496 = vmatprep.subr.bf16.mxu0 0
        %1497 = vmatpush1.bf16.msra.mxu0 %v1479
        %1498 = vmatprep.subr.bf16.mxu0 0
        %1499 = vmatpush1.bf16.msra.mxu0 %v1480
        %1500 = vmatprep.subr.bf16.mxu0 0
        %1501 = vmatpush1.bf16.msra.mxu0 %v1481
        %1502 = vmatprep.subr.bf16.mxu0 0
        %1503 = vmatpush1.bf16.msra.mxu0 %v1482
        %1504 = vmatprep.subr.bf16.mxu0 0
        %1505 = vmatpush1.bf16.msra.mxu0 %v1483
        %1506 = vmatprep.subr.bf16.mxu0 0
        %1507 = vmatpush1.bf16.msra.mxu0 %v1484
        %1508 = vmatprep.subr.bf16.mxu0 0
        %1509 = vmatpush1.bf16.msra.mxu0 %v1485
        %1510 = vmatprep.subr.bf16.mxu0 0
        %1511 = vmatpush1.bf16.msra.mxu0 0
        %1512 = vmatprep.subr.bf16.mxu0 0
        %1513 = vmatpush1.bf16.msra.mxu0 0
        %1514 = vmatprep.subr.bf16.mxu0 0
        %1515 = vmatpush1.bf16.msra.mxu0 0
        %1516 = vmatprep.subr.bf16.mxu0 0
        %1517 = vmatpush1.bf16.msra.mxu0 0
        %1518 = vmatprep.subr.bf16.mxu0 0
        %1519 = vmatpush1.bf16.msra.mxu0 0
        %1520 = vmatprep.subr.bf16.mxu0 0
        %1521 = vmatpush1.bf16.msra.mxu0 0
        %1522 = vmatprep.subr.bf16.mxu0 0
        %1523 = vmatpush1.bf16.msra.mxu0 0
        %1524 = vmatprep.subr.bf16.mxu0 0
        %1525 = vmatpush1.bf16.msra.mxu0 0
        %1526 = vmatprep.mubr.bf16.mxu0 0
        %1527 = vmatmul.mubr.bf16.gmra.mrb[0].mxu0 %v1429
        %v1528 = vpop.f32.mrb[0].mxu0
        %v1529 = vadd.f32 0.0, %v1528
        %v1530 = vpop.f32.mrb[0].mxu0
        %v1531 = vpop.f32.mrb[0].mxu0
        %v1532 = vpop.f32.mrb[0].mxu0
        %1533 = vdwg.mxu0
        %v1534 = vmax.f32 %v1529, 0.0
        %v1535 = vpack.c.bf16 %v1534, %v1534
        %v1536 = vld [vmem:[#allocation7 + $0x24] sm:$0xf]
        %v1537 = vld [vmem:[#allocation7 + $0x54] sm:$0xf]
        %v1538 = vld [vmem:[#allocation7 + $0x84] sm:$0xf]
        %v1539 = vld [vmem:[#allocation7 + $0xb4] sm:$0xf]
        %v1540 = vld [vmem:[#allocation7 + $0xe4] sm:$0xf]
        %v1541 = vld [vmem:[#allocation7 + $0x114] sm:$0xf]
        %v1542 = vld [vmem:[#allocation7 + $0x144] sm:$0xf]
        %v1543 = vld [vmem:[#allocation7 + $0x174] sm:$0xf]
        %v1544 = vld [vmem:[#allocation7 + $0x1a4] sm:$0xf]
        %v1545 = vld [vmem:[#allocation7 + $0x1d4] sm:$0xf]
        %v1546 = vld [vmem:[#allocation7 + $0x204] sm:$0xf]
        %v1547 = vld [vmem:[#allocation7 + $0x234] sm:$0xf]
        %v1548 = vld [vmem:[#allocation7 + $0x264] sm:$0xf]
        %v1549 = vld [vmem:[#allocation7 + $0x294] sm:$0xf]
        %v1550 = vld [vmem:[#allocation7 + $0x2c4] sm:$0xf]
        %v1551 = vld [vmem:[#allocation7 + $0x2f4] sm:$0xf]
        %v1568 = vunpack.c.l.b16 %v1536
        %v1569 = vunpack.c.l.b16 %v1537
        %v1570 = vunpack.c.l.b16 %v1538
        %v1571 = vunpack.c.l.b16 %v1539
        %v1572 = vunpack.c.l.b16 %v1540
        %v1573 = vunpack.c.l.b16 %v1541
        %v1574 = vunpack.c.l.b16 %v1542
        %v1575 = vunpack.c.l.b16 %v1543
        %v1576 = vunpack.c.l.b16 %v1544
        %v1577 = vunpack.c.l.b16 %v1545
        %v1578 = vunpack.c.l.b16 %v1546
        %v1579 = vunpack.c.l.b16 %v1547
        %v1580 = vunpack.c.l.b16 %v1548
        %v1581 = vunpack.c.l.b16 %v1549
        %v1582 = vunpack.c.l.b16 %v1550
        %v1583 = vunpack.c.l.b16 %v1551
        %v1584 = vpack.c.b16 %v1569, %v1568
        %v1585 = vpack.c.b16 %v1571, %v1570
        %v1586 = vpack.c.b16 %v1573, %v1572
        %v1587 = vpack.c.b16 %v1575, %v1574
        %v1588 = vpack.c.b16 %v1577, %v1576
        %v1589 = vpack.c.b16 %v1579, %v1578
        %v1590 = vpack.c.b16 %v1581, %v1580
        %v1591 = vpack.c.b16 %v1583, %v1582
        %1600 = vmatprep.subr.bf16.mxu0 0
        %1601 = vmatpush1.bf16.msra.mxu0 %v1584
        %1602 = vmatprep.subr.bf16.mxu0 0
        %1603 = vmatpush1.bf16.msra.mxu0 %v1585
        %1604 = vmatprep.subr.bf16.mxu0 0
        %1605 = vmatpush1.bf16.msra.mxu0 %v1586
        %1606 = vmatprep.subr.bf16.mxu0 0
        %1607 = vmatpush1.bf16.msra.mxu0 %v1587
        %1608 = vmatprep.subr.bf16.mxu0 0
        %1609 = vmatpush1.bf16.msra.mxu0 %v1588
        %1610 = vmatprep.subr.bf16.mxu0 0
        %1611 = vmatpush1.bf16.msra.mxu0 %v1589
        %1612 = vmatprep.subr.bf16.mxu0 0
        %1613 = vmatpush1.bf16.msra.mxu0 %v1590
        %1614 = vmatprep.subr.bf16.mxu0 0
        %1615 = vmatpush1.bf16.msra.mxu0 %v1591
        %1616 = vmatprep.subr.bf16.mxu0 0
        %1617 = vmatpush1.bf16.msra.mxu0 0
        %1618 = vmatprep.subr.bf16.mxu0 0
        %1619 = vmatpush1.bf16.msra.mxu0 0
        %1620 = vmatprep.subr.bf16.mxu0 0
        %1621 = vmatpush1.bf16.msra.mxu0 0
        %1622 = vmatprep.subr.bf16.mxu0 0
        %1623 = vmatpush1.bf16.msra.mxu0 0
        %1624 = vmatprep.subr.bf16.mxu0 0
        %1625 = vmatpush1.bf16.msra.mxu0 0
        %1626 = vmatprep.subr.bf16.mxu0 0
        %1627 = vmatpush1.bf16.msra.mxu0 0
        %1628 = vmatprep.subr.bf16.mxu0 0
        %1629 = vmatpush1.bf16.msra.mxu0 0
        %1630 = vmatprep.subr.bf16.mxu0 0
        %1631 = vmatpush1.bf16.msra.mxu0 0
        %1632 = vmatprep.mubr.bf16.mxu0 0
        %1633 = vmatmul.mubr.bf16.gmra.mrb[0].mxu0 %v1535
        %v1634 = vpop.f32.mrb[0].mxu0
        %v1635 = vadd.f32 0.0, %v1634
        %v1636 = vpop.f32.mrb[0].mxu0
        %v1637 = vpop.f32.mrb[0].mxu0
        %v1638 = vpop.f32.mrb[0].mxu0
        %1639 = vdwg.mxu0
        %v1640 = vmax.f32 %v1635, 0.0
        %v1641 = vpack.c.bf16 %v1640, %v1640
        %v1642 = vld [vmem:[#allocation7 + $0x28] sm:$0xf]
        %v1643 = vld [vmem:[#allocation7 + $0x58] sm:$0xf]
        %v1644 = vld [vmem:[#allocation7 + $0x88] sm:$0xf]
        %v1645 = vld [vmem:[#allocation7 + $0xb8] sm:$0xf]
        %v1646 = vld [vmem:[#allocation7 + $0xe8] sm:$0xf]
        %v1647 = vld [vmem:[#allocation7 + $0x118] sm:$0xf]
        %v1648 = vld [vmem:[#allocation7 + $0x148] sm:$0xf]
        %v1649 = vld [vmem:[#allocation7 + $0x178] sm:$0xf]
        %v1650 = vld [vmem:[#allocation7 + $0x1a8] sm:$0xf]
        %v1651 = vld [vmem:[#allocation7 + $0x1d8] sm:$0xf]
        %v1652 = vld [vmem:[#allocation7 + $0x208] sm:$0xf]
        %v1653 = vld [vmem:[#allocation7 + $0x238] sm:$0xf]
        %v1654 = vld [vmem:[#allocation7 + $0x268] sm:$0xf]
        %v1655 = vld [vmem:[#allocation7 + $0x298] sm:$0xf]
        %v1656 = vld [vmem:[#allocation7 + $0x2c8] sm:$0xf]
        %v1657 = vld [vmem:[#allocation7 + $0x2f8] sm:$0xf]
        %v1674 = vunpack.c.l.b16 %v1642
        %v1675 = vunpack.c.l.b16 %v1643
        %v1676 = vunpack.c.l.b16 %v1644
        %v1677 = vunpack.c.l.b16 %v1645
        %v1678 = vunpack.c.l.b16 %v1646
        %v1679 = vunpack.c.l.b16 %v1647
        %v1680 = vunpack.c.l.b16 %v1648
        %v1681 = vunpack.c.l.b16 %v1649
        %v1682 = vunpack.c.l.b16 %v1650
        %v1683 = vunpack.c.l.b16 %v1651
        %v1684 = vunpack.c.l.b16 %v1652
        %v1685 = vunpack.c.l.b16 %v1653
        %v1686 = vunpack.c.l.b16 %v1654
        %v1687 = vunpack.c.l.b16 %v1655
        %v1688 = vunpack.c.l.b16 %v1656
        %v1689 = vunpack.c.l.b16 %v1657
        %v1690 = vpack.c.b16 %v1675, %v1674
        %v1691 = vpack.c.b16 %v1677, %v1676
        %v1692 = vpack.c.b16 %v1679, %v1678
        %v1693 = vpack.c.b16 %v1681, %v1680
        %v1694 = vpack.c.b16 %v1683, %v1682
        %v1695 = vpack.c.b16 %v1685, %v1684
        %v1696 = vpack.c.b16 %v1687, %v1686
        %v1697 = vpack.c.b16 %v1689, %v1688
        %1706 = vmatprep.subr.bf16.mxu0 0
        %1707 = vmatpush1.bf16.msra.mxu0 %v1690
        %1708 = vmatprep.subr.bf16.mxu0 0
        %1709 = vmatpush1.bf16.msra.mxu0 %v1691
        %1710 = vmatprep.subr.bf16.mxu0 0
        %1711 = vmatpush1.bf16.msra.mxu0 %v1692
        %1712 = vmatprep.subr.bf16.mxu0 0
        %1713 = vmatpush1.bf16.msra.mxu0 %v1693
        %1714 = vmatprep.subr.bf16.mxu0 0
        %1715 = vmatpush1.bf16.msra.mxu0 %v1694
        %1716 = vmatprep.subr.bf16.mxu0 0
        %1717 = vmatpush1.bf16.msra.mxu0 %v1695
        %1718 = vmatprep.subr.bf16.mxu0 0
        %1719 = vmatpush1.bf16.msra.mxu0 %v1696
        %1720 = vmatprep.subr.bf16.mxu0 0
        %1721 = vmatpush1.bf16.msra.mxu0 %v1697
        %1722 = vmatprep.subr.bf16.mxu0 0
        %1723 = vmatpush1.bf16.msra.mxu0 0
        %1724 = vmatprep.subr.bf16.mxu0 0
        %1725 = vmatpush1.bf16.msra.mxu0 0
        %1726 = vmatprep.subr.bf16.mxu0 0
        %1727 = vmatpush1.bf16.msra.mxu0 0
        %1728 = vmatprep.subr.bf16.mxu0 0
        %1729 = vmatpush1.bf16.msra.mxu0 0
        %1730 = vmatprep.subr.bf16.mxu0 0
        %1731 = vmatpush1.bf16.msra.mxu0 0
        %1732 = vmatprep.subr.bf16.mxu0 0
        %1733 = vmatpush1.bf16.msra.mxu0 0
        %1734 = vmatprep.subr.bf16.mxu0 0
        %1735 = vmatpush1.bf16.msra.mxu0 0
        %1736 = vmatprep.subr.bf16.mxu0 0
        %1737 = vmatpush1.bf16.msra.mxu0 0
        %1738 = vmatprep.mubr.bf16.mxu0 0
        %1739 = vmatmul.mubr.bf16.gmra.mrb[0].mxu0 %v1641
        %v1740 = vpop.f32.mrb[0].mxu0
        %v1741 = vadd.f32 0.0, %v1740
        %v1742 = vpop.f32.mrb[0].mxu0
        %v1743 = vpop.f32.mrb[0].mxu0
        %v1744 = vpop.f32.mrb[0].mxu0
        %1745 = vdwg.mxu0
        %1746 = vmatprep.subr.mxu0 0.0
        %1747 = vmatpush1.msra.mxu0 %v1741
        %1748 = vmatprep.subr.mxu0 0.0
        %1749 = vmatpush1.msra.mxu0 0.0
        %1750 = vmatprep.subr.mxu0 0.0
        %1751 = vmatpush1.msra.mxu0 0.0
        %1752 = vmatprep.subr.mxu0 0.0
        %1753 = vmatpush1.msra.mxu0 0.0
        %1754 = vmatprep.subr.mxu0 0.0
        %1755 = vmatpush1.msra.mxu0 0.0
        %1756 = vmatprep.subr.mxu0 0.0
        %1757 = vmatpush1.msra.mxu0 0.0
        %1758 = vmatprep.subr.mxu0 0.0
        %1759 = vmatpush1.msra.mxu0 0.0
        %1760 = vmatprep.subr.mxu0 0.0
        %1761 = vmatpush1.msra.mxu0 0.0
        %1762 = vmatprep.subr.mxu0 0.0
        %1763 = vmatpush1.msra.mxu0 0.0
        %1764 = vmatprep.subr.mxu0 0.0
        %1765 = vmatpush1.msra.mxu0 0.0
        %1766 = vmatprep.subr.mxu0 0.0
        %1767 = vmatpush1.msra.mxu0 0.0
        %1768 = vmatprep.subr.mxu0 0.0
        %1769 = vmatpush1.msra.mxu0 0.0
        %1770 = vmatprep.subr.mxu0 0.0
        %1771 = vmatpush1.msra.mxu0 0.0
        %1772 = vmatprep.subr.mxu0 0.0
        %1773 = vmatpush1.msra.mxu0 0.0
        %1774 = vmatprep.subr.mxu0 0.0
        %1775 = vmatpush1.msra.mxu0 0.0
        %1776 = vmatprep.subr.mxu0 0.0
        %1777 = vmatpush1.msra.mxu0 0.0
        %1778 = vmatprep.subr.mxu0 0.0
        %1779 = vmatpush1.msra.mxu0 0.0
        %1780 = vmatprep.subr.mxu0 0.0
        %1781 = vmatpush1.msra.mxu0 0.0
        %1782 = vmatprep.subr.mxu0 0.0
        %1783 = vmatpush1.msra.mxu0 0.0
        %1784 = vmatprep.subr.mxu0 0.0
        %1785 = vmatpush1.msra.mxu0 0.0
        %1786 = vmatprep.subr.mxu0 0.0
        %1787 = vmatpush1.msra.mxu0 0.0
        %1788 = vmatprep.subr.mxu0 0.0
        %1789 = vmatpush1.msra.mxu0 0.0
        %1790 = vmatprep.subr.mxu0 0.0
        %1791 = vmatpush1.msra.mxu0 0.0
        %1792 = vmatprep.subr.mxu0 0.0
        %1793 = vmatpush1.msra.mxu0 0.0
        %1794 = vmatprep.subr.mxu0 0.0
        %1795 = vmatpush1.msra.mxu0 0.0
        %1796 = vmatprep.subr.mxu0 0.0
        %1797 = vmatpush1.msra.mxu0 0.0
        %1798 = vmatprep.subr.mxu0 0.0
        %1799 = vmatpush1.msra.mxu0 0.0
        %1800 = vmatprep.subr.mxu0 0.0
        %1801 = vmatpush1.msra.mxu0 0.0
        %1802 = vmatprep.subr.mxu0 0.0
        %1803 = vmatpush1.msra.mxu0 0.0
        %1804 = vmatprep.subr.mxu0 0.0
        %1805 = vmatpush1.msra.mxu0 0.0
        %1806 = vmatprep.subr.mxu0 0.0
        %1807 = vmatpush1.msra.mxu0 0.0
        %1808 = vmatprep.subr.mxu0 0.0
        %1809 = vmatpush1.msra.mxu0 0.0
        %1810 = vmatprep.mubr.f32.mxu0 0.0
        %1811 = vmatmul.mubr.f32.gmra.mrb[0].mxu0 %v385
        %v1812 = vpop.f32.mrb[0].mxu0
        %v1813 = vadd.f32 0.0, %v1812
        %v1814 = vpop.f32.mrb[0].mxu0
        %1815 = vdwg.mxu0
        %v1816 = vmax.f32 %v1813, 0.0
        %v1817 = vpack.c.bf16 %v1816, %v1816
        %v1818 = vld [vmem:[#allocation7 + $0x2c] sm:$0xf]
        %v1819 = vld [vmem:[#allocation7 + $0x5c] sm:$0xf]
        %v1820 = vld [vmem:[#allocation7 + $0x8c] sm:$0xf]
        %v1821 = vld [vmem:[#allocation7 + $0xbc] sm:$0xf]
        %v1822 = vld [vmem:[#allocation7 + $0xec] sm:$0xf]
        %v1823 = vld [vmem:[#allocation7 + $0x11c] sm:$0xf]
        %v1824 = vld [vmem:[#allocation7 + $0x14c] sm:$0xf]
        %v1825 = vld [vmem:[#allocation7 + $0x17c] sm:$0xf]
        %v1826 = vld [vmem:[#allocation7 + $0x1ac] sm:$0xf]
        %v1827 = vld [vmem:[#allocation7 + $0x1dc] sm:$0xf]
        %v1828 = vld [vmem:[#allocation7 + $0x20c] sm:$0xf]
        %v1829 = vld [vmem:[#allocation7 + $0x23c] sm:$0xf]
        %v1830 = vld [vmem:[#allocation7 + $0x26c] sm:$0xf]
        %v1831 = vld [vmem:[#allocation7 + $0x29c] sm:$0xf]
        %v1832 = vld [vmem:[#allocation7 + $0x2cc] sm:$0xf]
        %v1833 = vld [vmem:[#allocation7 + $0x2fc] sm:$0xf]
        %v1850 = vunpack.c.l.b16 %v1818
        %v1851 = vunpack.c.l.b16 %v1819
        %v1852 = vunpack.c.l.b16 %v1820
        %v1853 = vunpack.c.l.b16 %v1821
        %v1854 = vunpack.c.l.b16 %v1822
        %v1855 = vunpack.c.l.b16 %v1823
        %v1856 = vunpack.c.l.b16 %v1824
        %v1857 = vunpack.c.l.b16 %v1825
        %v1858 = vunpack.c.l.b16 %v1826
        %v1859 = vunpack.c.l.b16 %v1827
        %v1860 = vunpack.c.l.b16 %v1828
        %v1861 = vunpack.c.l.b16 %v1829
        %v1862 = vunpack.c.l.b16 %v1830
        %v1863 = vunpack.c.l.b16 %v1831
        %v1864 = vunpack.c.l.b16 %v1832
        %v1865 = vunpack.c.l.b16 %v1833
        %v1866 = vpack.c.b16 %v1851, %v1850
        %v1867 = vpack.c.b16 %v1853, %v1852
        %v1868 = vpack.c.b16 %v1855, %v1854
        %v1869 = vpack.c.b16 %v1857, %v1856
        %v1870 = vpack.c.b16 %v1859, %v1858
        %v1871 = vpack.c.b16 %v1861, %v1860
        %v1872 = vpack.c.b16 %v1863, %v1862
        %v1873 = vpack.c.b16 %v1865, %v1864
        %1882 = vmatprep.subr.bf16.mxu0 0
        %1883 = vmatpush1.bf16.msra.mxu0 %v1866
        %1884 = vmatprep.subr.bf16.mxu0 0
        %1885 = vmatpush1.bf16.msra.mxu0 %v1867
        %1886 = vmatprep.subr.bf16.mxu0 0
        %1887 = vmatpush1.bf16.msra.mxu0 %v1868
        %1888 = vmatprep.subr.bf16.mxu0 0
        %1889 = vmatpush1.bf16.msra.mxu0 %v1869
        %1890 = vmatprep.subr.bf16.mxu0 0
        %1891 = vmatpush1.bf16.msra.mxu0 %v1870
        %1892 = vmatprep.subr.bf16.mxu0 0
        %1893 = vmatpush1.bf16.msra.mxu0 %v1871
        %1894 = vmatprep.subr.bf16.mxu0 0
        %1895 = vmatpush1.bf16.msra.mxu0 %v1872
        %1896 = vmatprep.subr.bf16.mxu0 0
        %1897 = vmatpush1.bf16.msra.mxu0 %v1873
        %1898 = vmatprep.subr.bf16.mxu0 0
        %1899 = vmatpush1.bf16.msra.mxu0 0
        %1900 = vmatprep.subr.bf16.mxu0 0
        %1901 = vmatpush1.bf16.msra.mxu0 0
        %1902 = vmatprep.subr.bf16.mxu0 0
        %1903 = vmatpush1.bf16.msra.mxu0 0
        %1904 = vmatprep.subr.bf16.mxu0 0
        %1905 = vmatpush1.bf16.msra.mxu0 0
        %1906 = vmatprep.subr.bf16.mxu0 0
        %1907 = vmatpush1.bf16.msra.mxu0 0
        %1908 = vmatprep.subr.bf16.mxu0 0
        %1909 = vmatpush1.bf16.msra.mxu0 0
        %1910 = vmatprep.subr.bf16.mxu0 0
        %1911 = vmatpush1.bf16.msra.mxu0 0
        %1912 = vmatprep.subr.bf16.mxu0 0
        %1913 = vmatpush1.bf16.msra.mxu0 0
        %1914 = vmatprep.mubr.bf16.mxu0 0
        %1915 = vmatmul.mubr.bf16.gmra.mrb[0].mxu0 %v1817
        %v1916 = vpop.f32.mrb[0].mxu0
        %v1917 = vadd.f32 0.0, %v1916
        %v1918 = vpop.f32.mrb[0].mxu0
        %v1919 = vpop.f32.mrb[0].mxu0
        %v1920 = vpop.f32.mrb[0].mxu0
        %1921 = vdwg.mxu0
        %1922 = vmatprep.subr.mxu0 0.0
        %1923 = vmatpush1.msra.mxu0 %v1917
        %1924 = vmatprep.subr.mxu0 0.0
        %1925 = vmatpush1.msra.mxu0 0.0
        %1926 = vmatprep.subr.mxu0 0.0
        %1927 = vmatpush1.msra.mxu0 0.0
        %1928 = vmatprep.subr.mxu0 0.0
        %1929 = vmatpush1.msra.mxu0 0.0
        %1930 = vmatprep.subr.mxu0 0.0
        %1931 = vmatpush1.msra.mxu0 0.0
        %1932 = vmatprep.subr.mxu0 0.0
        %1933 = vmatpush1.msra.mxu0 0.0
        %1934 = vmatprep.subr.mxu0 0.0
        %1935 = vmatpush1.msra.mxu0 0.0
        %1936 = vmatprep.subr.mxu0 0.0
        %1937 = vmatpush1.msra.mxu0 0.0
        %1938 = vmatprep.subr.mxu0 0.0
        %1939 = vmatpush1.msra.mxu0 0.0
        %1940 = vmatprep.subr.mxu0 0.0
        %1941 = vmatpush1.msra.mxu0 0.0
        %1942 = vmatprep.subr.mxu0 0.0
        %1943 = vmatpush1.msra.mxu0 0.0
        %1944 = vmatprep.subr.mxu0 0.0
        %1945 = vmatpush1.msra.mxu0 0.0
        %1946 = vmatprep.subr.mxu0 0.0
        %1947 = vmatpush1.msra.mxu0 0.0
        %1948 = vmatprep.subr.mxu0 0.0
        %1949 = vmatpush1.msra.mxu0 0.0
        %1950 = vmatprep.subr.mxu0 0.0
        %1951 = vmatpush1.msra.mxu0 0.0
        %1952 = vmatprep.subr.mxu0 0.0
        %1953 = vmatpush1.msra.mxu0 0.0
        %1954 = vmatprep.subr.mxu0 0.0
        %1955 = vmatpush1.msra.mxu0 0.0
        %1956 = vmatprep.subr.mxu0 0.0
        %1957 = vmatpush1.msra.mxu0 0.0
        %1958 = vmatprep.subr.mxu0 0.0
        %1959 = vmatpush1.msra.mxu0 0.0
        %1960 = vmatprep.subr.mxu0 0.0
        %1961 = vmatpush1.msra.mxu0 0.0
        %1962 = vmatprep.subr.mxu0 0.0
        %1963 = vmatpush1.msra.mxu0 0.0
        %1964 = vmatprep.subr.mxu0 0.0
        %1965 = vmatpush1.msra.mxu0 0.0
        %1966 = vmatprep.subr.mxu0 0.0
        %1967 = vmatpush1.msra.mxu0 0.0
        %1968 = vmatprep.subr.mxu0 0.0
        %1969 = vmatpush1.msra.mxu0 0.0
        %1970 = vmatprep.subr.mxu0 0.0
        %1971 = vmatpush1.msra.mxu0 0.0
        %1972 = vmatprep.subr.mxu0 0.0
        %1973 = vmatpush1.msra.mxu0 0.0
        %1974 = vmatprep.subr.mxu0 0.0
        %1975 = vmatpush1.msra.mxu0 0.0
        %1976 = vmatprep.subr.mxu0 0.0
        %1977 = vmatpush1.msra.mxu0 0.0
        %1978 = vmatprep.subr.mxu0 0.0
        %1979 = vmatpush1.msra.mxu0 0.0
        %1980 = vmatprep.subr.mxu0 0.0
        %1981 = vmatpush1.msra.mxu0 0.0
        %1982 = vmatprep.subr.mxu0 0.0
        %1983 = vmatpush1.msra.mxu0 0.0
        %1984 = vmatprep.subr.mxu0 0.0
        %1985 = vmatpush1.msra.mxu0 0.0
        %1986 = vmatprep.mubr.f32.mxu0 0.0
        %1987 = vmatmul.mubr.f32.gmra.mrb[0].mxu0 %v385
        %v1988 = vpop.f32.mrb[0].mxu0
        %v1989 = vadd.f32 0.0, %v1988
        %v1990 = vpop.f32.mrb[0].mxu0
        %1991 = vdwg.mxu0
        %vm1992 = vcmp.lt.s32.totalorder %v1214, 8
        %v1993 = vsel %vm1992, %v1989, -1e+30
        %1994 = vmax.xlane.f32.xlu0 %v1993
        %v1995 = vpop.xlane.xlu0 %1994
        %v1996 = vsub.f32 %v1993, %v1995
        %v1997 = vmul.f32 %v1996, 1.442695
        %v1998 = vpow.pop %v1997
        %1999 = vadd.xlane.f32.xlu0 %v1998
        %v2000 = vpop.xlane.xlu0 %1999
        %v2001 = vrcp.pop %v2000
        %v2002 = vmul.f32 %v1998, %v2001
        %2003 = vst [vmem:[%s267] sm:$0xff] %v2002
        %s2004 = sand.u32 %s109, 1
        %s2005 = scalar_lea.sflag [#allocation4], %s2004
        %s2006 = sand.u32 %s109, 1
        %s2007 = smul.addr %s2006, 8
        %s2008 = scalar_lea.vmem [#allocation8], %s2007
        %s2009 = sand.u32 %s135, 1
        %s2010 = scalar_lea.sflag [#allocation10], %s2009
        %s2011 = sand.u32 %s135, 1
        %s2012 = smul.addr %s2011, 8
        %s2013 = scalar_lea.vmem [#allocation9], %s2012
        // Predicated region
        $region45: #{tpu_custom_call.1} parent=31 // pred_check
          %p2014 = pneg %p119
        $region46: #{tpu_custom_call.1} parent=31 // pred_check_branch
          %2016 = sbr.rel (%p2014) target = $region48
        $region47: #{tpu_custom_call.1} parent=31 // pred_region
          %s2018 = ssub.s32 128, 128
          %2019 = vsyncadd %s2005, %s2018
          %s2020 = smul.addr %s28, 128
          %s2021 = scalar_lea.hbm %s3, %s2020
          %s2023 = sshll.u32 %s2008, 4
          %s2024 = int_to_ptr.vmem [resolvable:$true] %s2023
          %2026 = dma.vmem_to_hbm [thread:$0]  %s2024, 128, %s2021, %s2005
        $region48: #{tpu_custom_call.1} parent=31 // pred_fallthru
          _
        // Predicated region
        $region49: #{tpu_custom_call.1} parent=31 // pred_check
          %p2027 = pneg %p145
        $region50: #{tpu_custom_call.1} parent=31 // pred_check_branch
          %2029 = sbr.rel (%p2027) target = $region52
        $region51: #{tpu_custom_call.1} parent=31 // pred_region
          %s2031 = ssub.s32 128, 128
          %2032 = vsyncadd %s2010, %s2031
          %s2033 = smul.addr %s28, 128
          %s2034 = scalar_lea.hbm %s4, %s2033
          %s2036 = sshll.u32 %s2013, 4
          %s2037 = int_to_ptr.vmem [resolvable:$true] %s2036
          %2039 = dma.vmem_to_hbm [thread:$0]  %s2037, 128, %s2034, %s2010
        $region52: #{tpu_custom_call.1} parent=31 // pred_fallthru
          _
      $region32: #{tpu_custom_call.1} parent=5 // pred_fallthru
        _
      %p2040 = scmp.le.s32.totalorder 2, %s23
      // Predicated region
      $region53: #{tpu_custom_call.1} parent=5 // pred_check
        %p2041 = pneg %p2040
      $region54: #{tpu_custom_call.1} parent=5 // pred_check_branch
        %2043 = sbr.rel (%p2041) target = $region56
      $region55: #{tpu_custom_call.1} parent=5 // pred_region
        %s2044 = ssub.s32 %s23, 2
        // Predicated region
        $region57: #{tpu_custom_call.1} parent=55 // pred_check
          %p2045 = pneg %p125
        $region58: #{tpu_custom_call.1} parent=55 // pred_check_branch
          %2047 = sbr.rel (%p2045) target = $region60
        $region59: #{tpu_custom_call.1} parent=55 // pred_region
          %s2048 = sand.u32 %s110, 1
          %s2049 = scalar_lea.sflag [#allocation4], %s2048
          %s2050 = sand.u32 %s110, 1
          %s2051 = smul.addr %s2050, 8
          %s2052 = scalar_lea.vmem [#allocation8], %s2051
          %2053 = dma.done %s2049, 128
        $region60: #{tpu_custom_call.1} parent=55 // pred_fallthru
          _
        // Predicated region
        $region61: #{tpu_custom_call.1} parent=55 // pred_check
          %p2054 = pneg %p151
        $region62: #{tpu_custom_call.1} parent=55 // pred_check_branch
          %2056 = sbr.rel (%p2054) target = $region64
        $region63: #{tpu_custom_call.1} parent=55 // pred_region
          %s2057 = sand.u32 %s136, 1
          %s2058 = scalar_lea.sflag [#allocation10], %s2057
          %s2059 = sand.u32 %s136, 1
          %s2060 = smul.addr %s2059, 8
          %s2061 = scalar_lea.vmem [#allocation9], %s2060
          %2062 = dma.done %s2058, 128
        $region64: #{tpu_custom_call.1} parent=55 // pred_fallthru
          _
      $region56: #{tpu_custom_call.1} parent=5 // pred_fallthru
        _
    $region6: #{tpu_custom_call.1} parent=1 // loop_footer
      %s27 = sadd.s32 1, %s23
    $region7: #{tpu_custom_call.1} parent=1 // loop_footer_branch
      %22 = sbr.rel target = $region3
    $region8: #{tpu_custom_call.1} parent=1 // loop_exit
      _
    %2063 = vsyncpa [#allocation3], 1
    %s2064 = scalar_lea.sflag [#allocation3], 1
    %2065 = vsyncpa %s2064, 1
    %2066 = vsyncpa [#allocation6], 1
    %s2067 = scalar_lea.sflag [#allocation6], 1
    %2068 = vsyncpa %s2067, 1
    %2069 = vsyncpa [#allocation4], 1
    %s2070 = scalar_lea.sflag [#allocation4], 1
    %2071 = vsyncpa %s2070, 1
    %2072 = vsyncpa [#allocation10], 1
    %s2073 = scalar_lea.sflag [#allocation10], 1
    %2074 = vsyncpa %s2073, 1

</llo_original>
